<compile_context>
chip_gen: v7x
topology: tpu7x:2x2x1
jax: 0.10.0
libtpu: 0.0.40
codegen_flags: <defaults>
</compile_context>

<pallas_src>
import functools

import jax
import jax.numpy as jnp
import numpy as np
from jax.experimental import pallas as pl
from jax.experimental.pallas import tpu as pltpu


# ----------------------------- fused kernel (one grid step per batch) -----------------------------
def _filmed_kernel(fvisu_ref, fcoord_ref, fword_ref, cscore_ref, wmask_ref,
                   w_am_ref, b_am_ref, w_as_ref, b_as_ref,
                   w_gd_ref, b_gd_ref,
                   w1v_ref, w1c_ref,
                   fmodu_ref, attn_lang_ref, attn_score_ref,
                   *, hw_true):
    f32 = jnp.float32

    x = fvisu_ref[0]          # (Dv, HWp) bf16 ; lanes >= hw_true are zero-padded
    c = fcoord_ref[0]         # (nc, HWp) f32  ; lanes >= hw_true are zero-padded
    fword = fword_ref[0]      # (Dl, N)   f32  (channel-first, as the module's permute does)
    cscore = cscore_ref[0]    # (1,  N)   f32
    wmask = wmask_ref[0]      # (1,  N)   f32  (0/1)

    n = fword.shape[1]
    emb = w1v_ref.shape[0]
    inv_hw = 1.0 / hw_true

    # ---------------- attention / language path ----------------
    # tile_visu = mean over TRUE spatial positions (padded lanes are zero)
    tile_visu = jnp.sum(x.astype(f32), axis=1, keepdims=True) * inv_hw     # (Dv, 1)

    # 'prod' fusion: context_tile = tile_visu * fword * context_score
    ct = tile_visu * fword * cscore                                        # (Dv, N)

    # attn_map: Conv1d(Dv -> emb//2, k=1) + tanh
    attn_feat = jnp.tanh(
        jnp.dot(w_am_ref[...], ct, preferred_element_type=f32)
        + b_am_ref[...])                                                   # (half, N)

    # attn_score: Conv1d(emb//2 -> 1, k=1)  (VPU mul + sublane reduce; no M=1 MXU pass)
    attn_score = (jnp.sum(w_as_ref[...] * attn_feat, axis=0, keepdims=True)
                  + b_as_ref[0])                                           # (1, N)
    attn_score_ref[0] = attn_score

    # ---------------- mask_softmax (temperature=10, clssep=False, lstm=False) ----------------
    z = attn_score * 10.0
    z = z - jnp.max(z, axis=1, keepdims=True)
    ez = jnp.exp(z)
    score = ez / jnp.sum(ez, axis=1, keepdims=True)                        # exact recip (tiny)

    idx = jax.lax.broadcasted_iota(jnp.int32, (1, n), 1)
    mask0 = jnp.where(idx == 0, 0.0, wmask)                                # zero position 0
    # assumes word_mask is exactly 0/1 (matches reference one_hot(sum) behavior)
    s_int = jnp.sum(mask0, axis=1, keepdims=True).astype(jnp.int32)        # (1, 1)
    maskf = jnp.where(idx == s_int, 0.0, mask0)                            # zero position sum

    mask_score = score * maskf
    mask_score = mask_score / (jnp.sum(mask_score, axis=1, keepdims=True) + 1e-8)   # (1, N)

    # attn_lang = sum_n mask_score[n] * fword[:, n]
    attn_lang = jnp.sum(fword * mask_score, axis=1, keepdims=True)         # (Dl, 1)
    attn_lang_ref[0] = attn_lang

    # gamme_decode: Linear(Dl -> 2*emb), split, tanh  -> (E,1) columns
    film = jnp.tanh(
        jnp.dot(w_gd_ref[...], attn_lang, preferred_element_type=f32)
        + b_gd_ref[...])                                                   # (2E, 1)
    gamma = film[:emb, :]                                                  # (E, 1)
    beta = film[emb:, :]                                                   # (E, 1)

    # ---------------- conv1 (1x1) + InstanceNorm + FiLM + ReLU + residual ----------------
    # Both contributions on the MXU, f32 accumulation.  The conv bias b1 is omitted:
    # a per-channel constant cancels exactly under InstanceNorm (mean subtraction).
    y = (jnp.dot(w1v_ref[...], x, preferred_element_type=f32)
         + jnp.dot(w1c_ref[...], c, preferred_element_type=f32))           # (E, HWp) f32

    # one-pass InstanceNorm stats (biased var, eps=1e-5, no affine); padded lanes are zero
    # so plain lane sums divided by the true hw are correct.
    s1 = jnp.sum(y, axis=1, keepdims=True)
    s2 = jnp.sum(y * y, axis=1, keepdims=True)
    mu = s1 * inv_hw
    var = s2 * inv_hw - mu * mu
    inv_std = jax.lax.rsqrt(var + 1e-5)

    # fold normalization into FiLM: gamma*(y - mu)*inv_std + beta = scale*y + shift
    scale = gamma * inv_std                                                # (E, 1)
    shift = beta - mu * scale                                              # (E, 1)
    fm = jnp.maximum(scale * y + shift, 0.0)

    # residual (requires emb == Dv); add in f32, store in the (bf16) output dtype
    fmodu_ref[0] = (x.astype(f32) + fm).astype(fmodu_ref.dtype)


# ----------------------------- wrapper -----------------------------
def filmed_conv_block_context(fvisu, fword, context_score, fcoord, word_mask, params):
    """fvisu: (B, Dv, H, W) NCHW; fword: (B, N, Dl); context_score: (B, N);
       fcoord: (B, nc, H, W); word_mask: (B, N) 0/1.
       Returns (fmodu NCHW (B, E, H, W) bf16, attn_lang (B, Dl) f32, attn_score (B, N) f32)."""
    B, Dv, H, W = fvisu.shape
    _, N, Dl = fword.shape
    nc = fcoord.shape[1]
    assert Dv == Dl
    HW = H * W
    HWp = ((HW + 127) // 128) * 128          # lane-dense padding; stats use true HW
    emb = params["b1"].shape[-1]
    half = params["b_attn_map"].shape[-1]
    assert Dv == emb                          # required by the residual connection

    f32, bf16 = jnp.float32, jnp.bfloat16

    # NCHW-native: only flatten H,W (free reshape; no transpose of the big tensors)
    fvisu_flat = fvisu.reshape(B, Dv, HW)
    fcoord_flat = fcoord.reshape(B, nc, HW)
    if HWp != HW:
        pad = ((0, 0), (0, 0), (0, HWp - HW))
        fvisu_flat = jnp.pad(fvisu_flat, pad)
        fcoord_flat = jnp.pad(fcoord_flat, pad)
    fvisu_flat = fvisu_flat.astype(bf16)      # MXU operand
    fcoord_flat = fcoord_flat.astype(f32)
    # the module itself does fword.permute(0, 2, 1); this transpose is tiny (N x Dl)
    fword_t = jnp.transpose(fword, (0, 2, 1)).astype(f32)                  # (B, Dl, N)
    cscore = context_score.reshape(B, 1, N).astype(f32)
    wmask = word_mask.reshape(B, 1, N).astype(f32)

    # weights in their native PyTorch orientation (channel-first matmuls)
    w_am = params["w_attn_map"].astype(f32)                                # (half, Dv)
    b_am = params["b_attn_map"].reshape(half, 1).astype(f32)
    w_as = params["w_attn_score"].reshape(half, 1).astype(f32)             # column
    b_as = params["b_attn_score"].reshape(1).astype(f32)                   # SMEM scalar
    w_gd = params["w_gamma_decode"].astype(f32)                            # (2*emb, Dl)
    b_gd = params["b_gamma_decode"].reshape(2 * emb, 1).astype(f32)
    w1 = params["w_conv1"].astype(f32)                                     # (emb, Dv+nc)
    w1v = w1[:, :Dv].astype(bf16)                                          # (emb, Dv)  MXU bf16
    w1c = w1[:, Dv:]                                                       # (emb, nc)  MXU f32 (K small)
    # params["b1"] is intentionally NOT passed: the conv bias cancels under InstanceNorm.

    def per_batch(d0, d1):
        return pl.BlockSpec((1, d0, d1), lambda b: (b, 0, 0))

    def whole(shape):
        nd = len(shape)
        return pl.BlockSpec(shape, lambda b, _nd=nd: (0,) * _nd)

    kernel = functools.partial(_filmed_kernel, hw_true=HW)

    fmodu_flat, attn_lang, attn_score = pl.pallas_call(
        kernel,
        grid=(B,),
        in_specs=[
            per_batch(Dv, HWp),      # fvisu (bf16, zero-padded lanes)
            per_batch(nc, HWp),      # fcoord (f32, zero-padded lanes)
            per_batch(Dl, N),        # fword^T
            per_batch(1, N),         # context_score (lane-dense)
            per_batch(1, N),         # word_mask     (lane-dense)
            whole((half, Dv)),       # attn_map weight
            whole((half, 1)),        # attn_map bias
            whole((half, 1)),        # attn_score weight (column)
            pl.BlockSpec(memory_space=pltpu.MemorySpace.SMEM),   # attn_score bias (scalar)
            whole((2 * emb, Dl)),    # gamme_decode weight
            whole((2 * emb, 1)),     # gamme_decode bias
            whole((emb, Dv)),        # conv1 weight, visu part (bf16)
            whole((emb, nc)),        # conv1 weight, coord part (f32)
        ],
        out_specs=(
            per_batch(emb, HWp),     # fmodu (NCHW-native, bf16)
            per_batch(Dl, 1),        # attn_lang
            per_batch(1, N),         # attn_score (lane-dense)
        ),
        out_shape=(
            jax.ShapeDtypeStruct((B, emb, HWp), bf16),
            jax.ShapeDtypeStruct((B, Dl, 1), f32),
            jax.ShapeDtypeStruct((B, 1, N), f32),
        ),
        compiler_params=pltpu.CompilerParams(
            dimension_semantics=("parallel",),
            vmem_limit_bytes=64 * 1024 * 1024),
    )(fvisu_flat, fcoord_flat, fword_t, cscore, wmask,
      w_am, b_am, w_as, b_as, w_gd, b_gd, w1v, w1c)

    fmodu = fmodu_flat[:, :, :HW].reshape(B, emb, H, W)   # drop padded lanes; stays channel-first
    return fmodu, attn_lang.reshape(B, Dl), attn_score.reshape(B, N)


# ----------------------------- pure-JAX reference (PyTorch semantics, f32) -----------------------------
def _reference(fvisu, fword, context_score, fcoord, word_mask, params):
    B, Dv, H, W = fvisu.shape
    _, N, Dl = fword.shape
    emb = params["b1"].shape[-1]
    hp = jax.lax.Precision.HIGHEST

    fword_t = jnp.transpose(fword, (0, 2, 1))                             # (B, Dl, N)
    tile_visu = jnp.mean(fvisu.reshape(B, Dv, -1), axis=2, keepdims=True)
    context_tile = tile_visu * fword_t * context_score[:, None, :]
    attn_feat = jnp.tanh(
        jnp.einsum('hd,bdn->bhn', params["w_attn_map"], context_tile, precision=hp)
        + params["b_attn_map"][None, :, None])
    attn_score = (jnp.einsum('oh,bhn->bon', params["w_attn_score"], attn_feat,
                             precision=hp)[:, 0, :] + params["b_attn_score"][0])
    score = jax.nn.softmax(attn_score * 10.0, axis=1)
    mask = word_mask.at[:, 0].set(0.0)
    s = jnp.sum(mask, axis=1).astype(jnp.int32)
    mask = mask * (1.0 - jax.nn.one_hot(s, N))
    mask_score = score * mask
    mask_score = mask_score / (jnp.sum(mask_score, axis=1, keepdims=True) + 1e-8)
    attn_lang = jnp.einsum('bn,bnd->bd', mask_score, fword, precision=hp)
    film = (jnp.dot(attn_lang, params["w_gamma_decode"].T, precision=hp)
            + params["b_gamma_decode"])
    gammas = jnp.tanh(film[:, :emb])[:, :, None, None]
    betas = jnp.tanh(film[:, emb:])[:, :, None, None]
    xcat = jnp.concatenate([fvisu, fcoord], axis=1)
    y = (jnp.einsum('ec,bchw->behw', params["w_conv1"], xcat, precision=hp)
         + params["b1"][None, :, None, None])
    mu = jnp.mean(y, axis=(2, 3), keepdims=True)
    var = jnp.mean((y - mu) ** 2, axis=(2, 3), keepdims=True)
    yn = (y - mu) / jnp.sqrt(var + 1e-5)
    fm = jax.nn.relu(gammas * yn + betas)
    return fvisu + fm, attn_lang, attn_score


if __name__ == "__main__":
    B, D, H, W, N = 2, 64, 8, 8, 8          # Dvisu = Dlang = emb_size = D, half = D // 2
    emb, half = D, D // 2

    key = jax.random.PRNGKey(0)
    ks = jax.random.split(key, 12)
    fvisu = jax.random.normal(ks[0], (B, D, H, W), jnp.float32)
    fword = jax.random.normal(ks[1], (B, N, D), jnp.float32)
    context_score = jax.nn.softmax(jax.random.normal(ks[2], (B, N), jnp.float32), axis=1)
    fcoord = jax.random.normal(ks[3], (B, 8, H, W), jnp.float32)
    lengths = jnp.array([N, N - 2])
    word_mask = (jnp.arange(N)[None, :] < lengths[:, None]).astype(jnp.float32)

    # deterministic synthetic parameters (kaiming-scale-ish); no checkpoint load
    params = {
        "w_attn_map":     jax.random.normal(ks[4], (half, D), jnp.float32) * 0.05,
        "b_attn_map":     jax.random.normal(ks[5], (half,), jnp.float32) * 0.01,
        "w_attn_score":   jax.random.normal(ks[6], (1, half), jnp.float32) * 0.05,
        "b_attn_score":   jax.random.normal(ks[7], (1,), jnp.float32) * 0.01,
        "w_gamma_decode": jax.random.normal(ks[8], (2 * emb, D), jnp.float32) * 0.05,
        "b_gamma_decode": jax.random.normal(ks[9], (2 * emb,), jnp.float32) * 0.01,
        "w_conv1":        jax.random.normal(ks[10], (emb, D + 8), jnp.float32) * 0.05,
        "b1":             jax.random.normal(ks[11], (emb,), jnp.float32) * 0.01,
    }

    fmodu, attn_lang, attn_score = filmed_conv_block_context(
        fvisu, fword, context_score, fcoord, word_mask, params)
    jax.block_until_ready((fmodu, attn_lang, attn_score))

    rm, rl, rs = _reference(fvisu, fword, context_score, fcoord, word_mask, params)
    np.testing.assert_allclose(np.asarray(attn_score), np.asarray(rs), rtol=1e-2, atol=1e-2)
    np.testing.assert_allclose(np.asarray(attn_lang), np.asarray(rl), rtol=1e-2, atol=1e-2)
    # fmodu uses bf16 MXU operands and a bf16 output -> slightly looser tolerance
    np.testing.assert_allclose(np.asarray(fmodu, dtype=np.float32), np.asarray(rm),
                               rtol=3e-2, atol=3e-2)

    print("KERNEL_OK")
</pallas_src>

<mosaic_0001>
module attributes {stable_mosaic.version = 11 : i64} {
  func.func @_filmed_kernel(%arg0: i32, %arg1: memref<1x64x128xbf16, #tpu.memory_space<vmem>>, %arg2: memref<1x8x128xf32, #tpu.memory_space<vmem>>, %arg3: memref<1x64x8xf32, #tpu.memory_space<vmem>>, %arg4: memref<1x1x8xf32, #tpu.memory_space<vmem>>, %arg5: memref<1x1x8xf32, #tpu.memory_space<vmem>>, %arg6: memref<32x64xf32, #tpu.memory_space<vmem>>, %arg7: memref<32x1xf32, #tpu.memory_space<vmem>>, %arg8: memref<32x1xf32, #tpu.memory_space<vmem>>, %arg9: memref<1xf32, #tpu.memory_space<smem>>, %arg10: memref<128x64xf32, #tpu.memory_space<vmem>>, %arg11: memref<128x1xf32, #tpu.memory_space<vmem>>, %arg12: memref<64x64xbf16, #tpu.memory_space<vmem>>, %arg13: memref<64x8xf32, #tpu.memory_space<vmem>>, %arg14: memref<1x64x128xbf16, #tpu.memory_space<vmem>>, %arg15: memref<1x64x1xf32, #tpu.memory_space<vmem>>, %arg16: memref<1x1x8xf32, #tpu.memory_space<vmem>>) attributes {dimension_semantics = [#tpu.dimension_semantics<parallel>], iteration_bounds = array<i64: 2>, scalar_prefetch = 0 : i64, scratch_operands = 0 : i64, tpu.core_type = #tpu.core_type<tc>, window_params = [{transform_indices = @transform_0, window_bounds = array<i64: 1, 64, 128>}, {transform_indices = @transform_1, window_bounds = array<i64: 1, 8, 128>}, {transform_indices = @transform_2, window_bounds = array<i64: 1, 64, 8>}, {transform_indices = @transform_3, window_bounds = array<i64: 1, 1, 8>}, {transform_indices = @transform_4, window_bounds = array<i64: 1, 1, 8>}, {pipeline_mode = #tpu.pipeline_mode<synchronous>, transform_indices = @transform_5, window_bounds = array<i64: 32, 64>}, {pipeline_mode = #tpu.pipeline_mode<synchronous>, transform_indices = @transform_6, window_bounds = array<i64: 32, 1>}, {pipeline_mode = #tpu.pipeline_mode<synchronous>, transform_indices = @transform_7, window_bounds = array<i64: 32, 1>}, {transform_indices = @transform_8, window_bounds = array<i64: 1>}, {pipeline_mode = #tpu.pipeline_mode<synchronous>, transform_indices = @transform_9, window_bounds = array<i64: 128, 64>}, {pipeline_mode = #tpu.pipeline_mode<synchronous>, transform_indices = @transform_10, window_bounds = array<i64: 128, 1>}, {pipeline_mode = #tpu.pipeline_mode<synchronous>, transform_indices = @transform_11, window_bounds = array<i64: 64, 64>}, {pipeline_mode = #tpu.pipeline_mode<synchronous>, transform_indices = @transform_12, window_bounds = array<i64: 64, 8>}, {transform_indices = @transform_13, window_bounds = array<i64: 1, 64, 128>}, {transform_indices = @transform_14, window_bounds = array<i64: 1, 64, 1>}, {transform_indices = @transform_15, window_bounds = array<i64: 1, 1, 8>}]} {
    %c0 = arith.constant 0 : index
    %c0_0 = arith.constant 0 : index
    %c0_1 = arith.constant 0 : index
    %0 = vector.load %arg1[%c0, %c0_0, %c0_1] : memref<1x64x128xbf16, #tpu.memory_space<vmem>>, vector<1x64x128xbf16>
    %1 = vector.shape_cast %0 : vector<1x64x128xbf16> to vector<64x128xbf16>
    %c0_2 = arith.constant 0 : index
    %c0_3 = arith.constant 0 : index
    %c0_4 = arith.constant 0 : index
    %2 = vector.load %arg2[%c0_2, %c0_3, %c0_4] : memref<1x8x128xf32, #tpu.memory_space<vmem>>, vector<1x8x128xf32>
    %3 = vector.shape_cast %2 : vector<1x8x128xf32> to vector<8x128xf32>
    %c0_5 = arith.constant 0 : index
    %c0_6 = arith.constant 0 : index
    %c0_7 = arith.constant 0 : index
    %4 = vector.load %arg3[%c0_5, %c0_6, %c0_7] : memref<1x64x8xf32, #tpu.memory_space<vmem>>, vector<1x64x8xf32>
    %5 = vector.shape_cast %4 : vector<1x64x8xf32> to vector<64x8xf32>
    %c0_8 = arith.constant 0 : index
    %c0_9 = arith.constant 0 : index
    %c0_10 = arith.constant 0 : index
    %6 = vector.load %arg4[%c0_8, %c0_9, %c0_10] : memref<1x1x8xf32, #tpu.memory_space<vmem>>, vector<1x1x8xf32>
    %7 = vector.shape_cast %6 : vector<1x1x8xf32> to vector<1x8xf32>
    %c0_11 = arith.constant 0 : index
    %c0_12 = arith.constant 0 : index
    %c0_13 = arith.constant 0 : index
    %8 = vector.load %arg5[%c0_11, %c0_12, %c0_13] : memref<1x1x8xf32, #tpu.memory_space<vmem>>, vector<1x1x8xf32>
    %9 = vector.shape_cast %8 : vector<1x1x8xf32> to vector<1x8xf32>
    %10 = arith.extf %1 : vector<64x128xbf16> to vector<64x128xf32>
    %cst = arith.constant dense<0.000000e+00> : vector<64xf32>
    %11 = vector.multi_reduction <add>, %10, %cst [1] : vector<64x128xf32> to vector<64xf32>
    %12 = vector.shape_cast %11 : vector<64xf32> to vector<64x1xf32>
    %cst_14 = arith.constant 1.562500e-02 : f32
    %13 = vector.broadcast %cst_14 : f32 to vector<64x1xf32>
    %14 = arith.mulf %12, %13 : vector<64x1xf32>
    %15 = vector.broadcast %14 : vector<64x1xf32> to vector<64x8xf32>
    %16 = arith.mulf %15, %5 : vector<64x8xf32>
    %17 = vector.broadcast %7 : vector<1x8xf32> to vector<64x8xf32>
    %18 = arith.mulf %16, %17 : vector<64x8xf32>
    %c0_15 = arith.constant 0 : index
    %c0_16 = arith.constant 0 : index
    %19 = vector.load %arg6[%c0_15, %c0_16] : memref<32x64xf32, #tpu.memory_space<vmem>>, vector<32x64xf32>
    %cst_17 = arith.constant dense<0.000000e+00> : vector<32x8xf32>
    %20 = tpu.matmul %19, %18, %cst_17 {dimension_numbers = #tpu.dot_dimension_numbers<[1], [0], [0], [1], [0, 0, 1, 1], [], []>} : vector<32x64xf32>, vector<64x8xf32>, vector<32x8xf32> -> vector<32x8xf32>
    %c0_18 = arith.constant 0 : index
    %c0_19 = arith.constant 0 : index
    %21 = vector.load %arg7[%c0_18, %c0_19] : memref<32x1xf32, #tpu.memory_space<vmem>>, vector<32x1xf32>
    %22 = vector.broadcast %21 : vector<32x1xf32> to vector<32x8xf32>
    %23 = arith.addf %20, %22 : vector<32x8xf32>
    %24 = math.tanh %23 : vector<32x8xf32>
    %c0_20 = arith.constant 0 : index
    %c0_21 = arith.constant 0 : index
    %25 = vector.load %arg8[%c0_20, %c0_21] : memref<32x1xf32, #tpu.memory_space<vmem>>, vector<32x1xf32>
    %26 = vector.broadcast %25 : vector<32x1xf32> to vector<32x8xf32>
    %27 = arith.mulf %26, %24 : vector<32x8xf32>
    %cst_22 = arith.constant dense<0.000000e+00> : vector<8xf32>
    %28 = vector.multi_reduction <add>, %27, %cst_22 [0] : vector<32x8xf32> to vector<8xf32>
    %29 = vector.shape_cast %28 : vector<8xf32> to vector<1x8xf32>
    %c0_23 = arith.constant 0 : index
    %30 = memref.load %arg9[%c0_23] : memref<1xf32, #tpu.memory_space<smem>>
    %31 = vector.broadcast %30 : f32 to vector<1x8xf32>
    %32 = arith.addf %29, %31 : vector<1x8xf32>
    %c0_24 = arith.constant 0 : index
    %c0_25 = arith.constant 0 : index
    %c0_26 = arith.constant 0 : index
    %33 = vector.load %arg16[%c0_24, %c0_25, %c0_26] : memref<1x1x8xf32, #tpu.memory_space<vmem>>, vector<1x1x8xf32>
    %34 = vector.shape_cast %33 : vector<1x1x8xf32> to vector<1x8xf32>
    %35 = vector.shape_cast %32 : vector<1x8xf32> to vector<1x1x8xf32>
    tpu.vector_store %arg16[%c0_24, %c0_25, %c0_26], %35 {strides = array<i32>} : memref<1x1x8xf32, #tpu.memory_space<vmem>>, vector<1x1x8xf32>,
    %cst_27 = arith.constant 1.000000e+01 : f32
    %36 = vector.broadcast %cst_27 : f32 to vector<1x8xf32>
    %37 = arith.mulf %32, %36 : vector<1x8xf32>
    %cst_28 = arith.constant dense<0xFF800000> : vector<1xf32>
    %38 = vector.multi_reduction <maximumf>, %37, %cst_28 [1] : vector<1x8xf32> to vector<1xf32>
    %39 = vector.shape_cast %38 : vector<1xf32> to vector<1x1xf32>
    %40 = vector.broadcast %39 : vector<1x1xf32> to vector<1x8xf32>
    %41 = arith.subf %37, %40 : vector<1x8xf32>
    %42 = math.exp %41 : vector<1x8xf32>
    %cst_29 = arith.constant dense<0.000000e+00> : vector<1xf32>
    %43 = vector.multi_reduction <add>, %42, %cst_29 [1] : vector<1x8xf32> to vector<1xf32>
    %44 = vector.shape_cast %43 : vector<1xf32> to vector<1x1xf32>
    %45 = vector.broadcast %44 : vector<1x1xf32> to vector<1x8xf32>
    %46 = arith.divf %42, %45 : vector<1x8xf32>
    %47 = tpu.iota {dimensions = array<i32: 1>} : vector<1x8xi32>
    %c0_i32 = arith.constant 0 : i32
    %48 = vector.broadcast %c0_i32 : i32 to vector<1x8xi32>
    %49 = arith.cmpi eq, %47, %48 : vector<1x8xi32>
    %cst_30 = arith.constant 0.000000e+00 : f32
    %50 = vector.broadcast %cst_30 : f32 to vector<1x8xf32>
    %51 = arith.select %49, %50, %9 : vector<1x8xi1>, vector<1x8xf32>
    %cst_31 = arith.constant dense<0.000000e+00> : vector<1xf32>
    %52 = vector.multi_reduction <add>, %51, %cst_31 [1] : vector<1x8xf32> to vector<1xf32>
    %53 = vector.shape_cast %52 : vector<1xf32> to vector<1x1xf32>
    %54 = arith.fptosi %53 : vector<1x1xf32> to vector<1x1xi32>
    %55 = vector.broadcast %54 : vector<1x1xi32> to vector<1x8xi32>
    %56 = arith.cmpi eq, %47, %55 : vector<1x8xi32>
    %cst_32 = arith.constant 0.000000e+00 : f32
    %57 = vector.broadcast %cst_32 : f32 to vector<1x8xf32>
    %58 = arith.select %56, %57, %51 : vector<1x8xi1>, vector<1x8xf32>
    %59 = arith.mulf %46, %58 : vector<1x8xf32>
    %cst_33 = arith.constant dense<0.000000e+00> : vector<1xf32>
    %60 = vector.multi_reduction <add>, %59, %cst_33 [1] : vector<1x8xf32> to vector<1xf32>
    %61 = vector.shape_cast %60 : vector<1xf32> to vector<1x1xf32>
    %cst_34 = arith.constant 9.99999993E-9 : f32
    %62 = vector.broadcast %cst_34 : f32 to vector<1x1xf32>
    %63 = arith.addf %61, %62 : vector<1x1xf32>
    %64 = vector.broadcast %63 : vector<1x1xf32> to vector<1x8xf32>
    %65 = arith.divf %59, %64 : vector<1x8xf32>
    %66 = vector.broadcast %65 : vector<1x8xf32> to vector<64x8xf32>
    %67 = arith.mulf %5, %66 : vector<64x8xf32>
    %cst_35 = arith.constant dense<0.000000e+00> : vector<64xf32>
    %68 = vector.multi_reduction <add>, %67, %cst_35 [1] : vector<64x8xf32> to vector<64xf32>
    %69 = vector.shape_cast %68 : vector<64xf32> to vector<64x1xf32>
    %c0_36 = arith.constant 0 : index
    %c0_37 = arith.constant 0 : index
    %c0_38 = arith.constant 0 : index
    %70 = vector.load %arg15[%c0_36, %c0_37, %c0_38] : memref<1x64x1xf32, #tpu.memory_space<vmem>>, vector<1x64x1xf32>
    %71 = vector.shape_cast %70 : vector<1x64x1xf32> to vector<64x1xf32>
    %72 = vector.shape_cast %69 : vector<64x1xf32> to vector<1x64x1xf32>
    tpu.vector_store %arg15[%c0_36, %c0_37, %c0_38], %72 {strides = array<i32>} : memref<1x64x1xf32, #tpu.memory_space<vmem>>, vector<1x64x1xf32>,
    %c0_39 = arith.constant 0 : index
    %c0_40 = arith.constant 0 : index
    %73 = vector.load %arg10[%c0_39, %c0_40] : memref<128x64xf32, #tpu.memory_space<vmem>>, vector<128x64xf32>
    %cst_41 = arith.constant dense<0.000000e+00> : vector<128x1xf32>
    %74 = tpu.matmul %73, %69, %cst_41 {dimension_numbers = #tpu.dot_dimension_numbers<[1], [0], [0], [1], [0, 0, 1, 1], [], []>} : vector<128x64xf32>, vector<64x1xf32>, vector<128x1xf32> -> vector<128x1xf32>
    %c0_42 = arith.constant 0 : index
    %c0_43 = arith.constant 0 : index
    %75 = vector.load %arg11[%c0_42, %c0_43] : memref<128x1xf32, #tpu.memory_space<vmem>>, vector<128x1xf32>
    %76 = arith.addf %74, %75 : vector<128x1xf32>
    %77 = math.tanh %76 : vector<128x1xf32>
    %78 = vector.extract_strided_slice %77 {offsets = [0, 0], sizes = [64, 1], strides = [1, 1]} : vector<128x1xf32> to vector<64x1xf32>
    %79 = vector.extract_strided_slice %77 {offsets = [64, 0], sizes = [64, 1], strides = [1, 1]} : vector<128x1xf32> to vector<64x1xf32>
    %c0_44 = arith.constant 0 : index
    %c0_45 = arith.constant 0 : index
    %80 = vector.load %arg12[%c0_44, %c0_45] : memref<64x64xbf16, #tpu.memory_space<vmem>>, vector<64x64xbf16>
    %cst_46 = arith.constant dense<0.000000e+00> : vector<64x128xf32>
    %81 = tpu.matmul %80, %1, %cst_46 {dimension_numbers = #tpu.dot_dimension_numbers<[1], [0], [0], [1], [0, 0, 1, 1], [], []>} : vector<64x64xbf16>, vector<64x128xbf16>, vector<64x128xf32> -> vector<64x128xf32>
    %c0_47 = arith.constant 0 : index
    %c0_48 = arith.constant 0 : index
    %82 = vector.load %arg13[%c0_47, %c0_48] : memref<64x8xf32, #tpu.memory_space<vmem>>, vector<64x8xf32>
    %cst_49 = arith.constant dense<0.000000e+00> : vector<64x128xf32>
    %83 = tpu.matmul %82, %3, %cst_49 {dimension_numbers = #tpu.dot_dimension_numbers<[1], [0], [0], [1], [0, 0, 1, 1], [], []>} : vector<64x8xf32>, vector<8x128xf32>, vector<64x128xf32> -> vector<64x128xf32>
    %84 = arith.addf %81, %83 : vector<64x128xf32>
    %cst_50 = arith.constant dense<0.000000e+00> : vector<64xf32>
    %85 = vector.multi_reduction <add>, %84, %cst_50 [1] : vector<64x128xf32> to vector<64xf32>
    %86 = vector.shape_cast %85 : vector<64xf32> to vector<64x1xf32>
    %87 = arith.mulf %84, %84 : vector<64x128xf32>
    %cst_51 = arith.constant dense<0.000000e+00> : vector<64xf32>
    %88 = vector.multi_reduction <add>, %87, %cst_51 [1] : vector<64x128xf32> to vector<64xf32>
    %89 = vector.shape_cast %88 : vector<64xf32> to vector<64x1xf32>
    %cst_52 = arith.constant 1.562500e-02 : f32
    %90 = vector.broadcast %cst_52 : f32 to vector<64x1xf32>
    %91 = arith.mulf %86, %90 : vector<64x1xf32>
    %cst_53 = arith.constant 1.562500e-02 : f32
    %92 = vector.broadcast %cst_53 : f32 to vector<64x1xf32>
    %93 = arith.mulf %89, %92 : vector<64x1xf32>
    %94 = arith.mulf %91, %91 : vector<64x1xf32>
    %95 = arith.subf %93, %94 : vector<64x1xf32>
    %cst_54 = arith.constant 9.99999974E-6 : f32
    %96 = vector.broadcast %cst_54 : f32 to vector<64x1xf32>
    %97 = arith.addf %95, %96 : vector<64x1xf32>
    %98 = math.rsqrt %97 : vector<64x1xf32>
    %99 = arith.mulf %78, %98 : vector<64x1xf32>
    %100 = arith.mulf %91, %99 : vector<64x1xf32>
    %101 = arith.subf %79, %100 : vector<64x1xf32>
    %102 = vector.broadcast %99 : vector<64x1xf32> to vector<64x128xf32>
    %103 = arith.mulf %102, %84 : vector<64x128xf32>
    %104 = vector.broadcast %101 : vector<64x1xf32> to vector<64x128xf32>
    %105 = arith.addf %103, %104 : vector<64x128xf32>
    %cst_55 = arith.constant 0.000000e+00 : f32
    %106 = vector.broadcast %cst_55 : f32 to vector<64x128xf32>
    %107 = arith.maximumf %105, %106 : vector<64x128xf32>
    %108 = arith.extf %1 : vector<64x128xbf16> to vector<64x128xf32>
    %109 = arith.addf %108, %107 : vector<64x128xf32>
    %110 = arith.truncf %109 : vector<64x128xf32> to vector<64x128xbf16>
    %c0_56 = arith.constant 0 : index
    %c0_57 = arith.constant 0 : index
    %c0_58 = arith.constant 0 : index
    %111 = vector.load %arg14[%c0_56, %c0_57, %c0_58] : memref<1x64x128xbf16, #tpu.memory_space<vmem>>, vector<1x64x128xbf16>
    %112 = vector.shape_cast %111 : vector<1x64x128xbf16> to vector<64x128xbf16>
    %113 = vector.shape_cast %110 : vector<64x128xbf16> to vector<1x64x128xbf16>
    tpu.vector_store %arg14[%c0_56, %c0_57, %c0_58], %113 {strides = array<i32>} : memref<1x64x128xbf16, #tpu.memory_space<vmem>>, vector<1x64x128xbf16>,
    return
  }
  func.func @transform_0(%arg0: i32) -> (i32, i32, i32) {
    %c0_i32 = arith.constant 0 : i32
    %c0_i32_0 = arith.constant 0 : i32
    %c0_i32_1 = arith.constant 0 : i32
    return %arg0, %c0_i32, %c0_i32_0 : i32, i32, i32
  }
  func.func @transform_1(%arg0: i32) -> (i32, i32, i32) {
    %c0_i32 = arith.constant 0 : i32
    %c0_i32_0 = arith.constant 0 : i32
    %c0_i32_1 = arith.constant 0 : i32
    return %arg0, %c0_i32, %c0_i32_0 : i32, i32, i32
  }
  func.func @transform_2(%arg0: i32) -> (i32, i32, i32) {
    %c0_i32 = arith.constant 0 : i32
    %c0_i32_0 = arith.constant 0 : i32
    %c0_i32_1 = arith.constant 0 : i32
    return %arg0, %c0_i32, %c0_i32_0 : i32, i32, i32
  }
  func.func @transform_3(%arg0: i32) -> (i32, i32, i32) {
    %c0_i32 = arith.constant 0 : i32
    %c0_i32_0 = arith.constant 0 : i32
    %c0_i32_1 = arith.constant 0 : i32
    return %arg0, %c0_i32, %c0_i32_0 : i32, i32, i32
  }
  func.func @transform_4(%arg0: i32) -> (i32, i32, i32) {
    %c0_i32 = arith.constant 0 : i32
    %c0_i32_0 = arith.constant 0 : i32
    %c0_i32_1 = arith.constant 0 : i32
    return %arg0, %c0_i32, %c0_i32_0 : i32, i32, i32
  }
  func.func @transform_5(%arg0: i32) -> (i32, i32) {
    %c0_i32 = arith.constant 0 : i32
    %c0_i32_0 = arith.constant 0 : i32
    %c0_i32_1 = arith.constant 0 : i32
    return %c0_i32, %c0_i32_0 : i32, i32
  }
  func.func @transform_6(%arg0: i32) -> (i32, i32) {
    %c0_i32 = arith.constant 0 : i32
    %c0_i32_0 = arith.constant 0 : i32
    %c0_i32_1 = arith.constant 0 : i32
    return %c0_i32, %c0_i32_0 : i32, i32
  }
  func.func @transform_7(%arg0: i32) -> (i32, i32) {
    %c0_i32 = arith.constant 0 : i32
    %c0_i32_0 = arith.constant 0 : i32
    %c0_i32_1 = arith.constant 0 : i32
    return %c0_i32, %c0_i32_0 : i32, i32
  }
  func.func @transform_8(%arg0: i32) -> i32 {
    %c0_i32 = arith.constant 0 : i32
    %c0_i32_0 = arith.constant 0 : i32
    return %c0_i32 : i32
  }
  func.func @transform_9(%arg0: i32) -> (i32, i32) {
    %c0_i32 = arith.constant 0 : i32
    %c0_i32_0 = arith.constant 0 : i32
    %c0_i32_1 = arith.constant 0 : i32
    return %c0_i32, %c0_i32_0 : i32, i32
  }
  func.func @transform_10(%arg0: i32) -> (i32, i32) {
    %c0_i32 = arith.constant 0 : i32
    %c0_i32_0 = arith.constant 0 : i32
    %c0_i32_1 = arith.constant 0 : i32
    return %c0_i32, %c0_i32_0 : i32, i32
  }
  func.func @transform_11(%arg0: i32) -> (i32, i32) {
    %c0_i32 = arith.constant 0 : i32
    %c0_i32_0 = arith.constant 0 : i32
    %c0_i32_1 = arith.constant 0 : i32
    return %c0_i32, %c0_i32_0 : i32, i32
  }
  func.func @transform_12(%arg0: i32) -> (i32, i32) {
    %c0_i32 = arith.constant 0 : i32
    %c0_i32_0 = arith.constant 0 : i32
    %c0_i32_1 = arith.constant 0 : i32
    return %c0_i32, %c0_i32_0 : i32, i32
  }
  func.func @transform_13(%arg0: i32) -> (i32, i32, i32) {
    %c0_i32 = arith.constant 0 : i32
    %c0_i32_0 = arith.constant 0 : i32
    %c0_i32_1 = arith.constant 0 : i32
    return %arg0, %c0_i32, %c0_i32_0 : i32, i32, i32
  }
  func.func @transform_14(%arg0: i32) -> (i32, i32, i32) {
    %c0_i32 = arith.constant 0 : i32
    %c0_i32_0 = arith.constant 0 : i32
    %c0_i32_1 = arith.constant 0 : i32
    return %arg0, %c0_i32, %c0_i32_0 : i32, i32, i32
  }
  func.func @transform_15(%arg0: i32) -> (i32, i32, i32) {
    %c0_i32 = arith.constant 0 : i32
    %c0_i32_0 = arith.constant 0 : i32
    %c0_i32_1 = arith.constant 0 : i32
    return %arg0, %c0_i32, %c0_i32_0 : i32, i32, i32
  }
}

</mosaic_0001>

<llo_original>
// kernel: tpu_custom_call.1
$region0: #{tpu_custom_call.1}
  #allocation0 [shape = 'u32[]', space=smem, size = 0x4, offset = 0x4, fixed_abs, tag = 'smem constant byte address 0x4 - core index']
  #allocation1 [shape = 'u32[144,128]{1,0:T(1,128)}', space=vmem, size = 0x12000, scoped, tag = 'internal scratch']
  #allocation2 [shape = 'f32[1]{0:T(128)S(6)}', space=smem, size = 0x200, scoped, tag = 'scoped memory for tpu_custom_call.1']
  %s0 = inlined_call_operand.hbm [shape: bf16[2,64,128], index: 0, kind: input, shape index: {}]
  %s1 = inlined_call_operand.hbm [shape: f32[2,8,128], index: 1, kind: input, shape index: {}]
  %s2 = inlined_call_operand.hbm [shape: f32[2,64,8], index: 2, kind: input, shape index: {}]
  %s3 = inlined_call_operand.hbm [shape: f32[2,1,8], index: 3, kind: input, shape index: {}]
  %s4 = inlined_call_operand.hbm [shape: f32[2,1,8], index: 4, kind: input, shape index: {}]
  %s5 = inlined_call_operand.hbm [shape: f32[32,64], index: 5, kind: input, shape index: {}]
  %s6 = inlined_call_operand.hbm [shape: f32[32,1], index: 6, kind: input, shape index: {}]
  %s7 = inlined_call_operand.hbm [shape: f32[32,1], index: 7, kind: input, shape index: {}]
  %s8 = inlined_call_operand.<no memory space> [shape: f32[1], index: 8, kind: input, shape index: {}]
  %s9 = inlined_call_operand.hbm [shape: f32[128,64], index: 9, kind: input, shape index: {}]
  %s10 = inlined_call_operand.hbm [shape: f32[128,1], index: 10, kind: input, shape index: {}]
  %s11 = inlined_call_operand.hbm [shape: bf16[64,64], index: 11, kind: input, shape index: {}]
  %s12 = inlined_call_operand.hbm [shape: f32[64,8], index: 12, kind: input, shape index: {}]
  %s13 = inlined_call_operand.hbm [shape: bf16[2,64,128], index: 13, kind: output, shape index: {0}]
  %s14 = inlined_call_operand.hbm [shape: f32[2,64,1], index: 14, kind: output, shape index: {1}]
  %s15 = inlined_call_operand.hbm [shape: f32[2,1,8], index: 15, kind: output, shape index: {2}]
  %16 = xla_tuple %s13, %s14, %s15
  %s17 = sld [smem:[#allocation0]]
  $region149: #{tpu_custom_call.1} parent=0
    _
  %s19 = ssub.s32 1, %s17
  %s20 = scalar_select 0, %s19, %s17
  %21 = sst [smem:[#allocation2]] %s8
  $region1: #{tpu_custom_call.1} parent=0
    #allocation3 [shape = 'u8[32768]{0}', space=vmem, size = 0x8000, scoped, tag = 'input window, operand 0']
    #allocation4 [shape = 's32[2]{0}', space=sflag, size = 0x8, scoped, tag = 'scoped memory for tpu_custom_call.1']
    #allocation5 [shape = 's32[2]{0}', space=sflag, size = 0x8, scoped, tag = 'scoped memory for tpu_custom_call.1']
    #allocation6 [shape = 'u8[8192]{0}', space=vmem, size = 0x2000, scoped, tag = 'input window, operand 1']
    #allocation7 [shape = 's32[2]{0}', space=sflag, size = 0x8, scoped, tag = 'scoped memory for tpu_custom_call.1']
    #allocation8 [shape = 'u8[65536]{0}', space=vmem, size = 0x10000, scoped, tag = 'input window, operand 2']
    #allocation9 [shape = 'u8[1024]{0}', space=vmem, size = 0x400, scoped, tag = 'input window, operand 3']
    #allocation10 [shape = 's32[2]{0}', space=sflag, size = 0x8, scoped, tag = 'scoped memory for tpu_custom_call.1']
    #allocation11 [shape = 'u8[1024]{0}', space=vmem, size = 0x400, scoped, tag = 'input window, operand 4']
    #allocation12 [shape = 'u8[16384]{0}', space=vmem, size = 0x4000, scoped, tag = 'input window, operand 5, single buffered']
    #allocation13 [shape = 's32[1]{0}', space=sflag, size = 0x4, scoped, tag = 'scoped memory for tpu_custom_call.1']
    #allocation14 [shape = 'u8[16384]{0}', space=vmem, size = 0x4000, scoped, tag = 'input window, operand 6, single buffered']
    #allocation15 [shape = 'u8[16384]{0}', space=vmem, size = 0x4000, scoped, tag = 'input window, operand 7, single buffered']
    #allocation16 [shape = 's32[1]{0}', space=sflag, size = 0x4, scoped, tag = 'scoped memory for tpu_custom_call.1']
    #allocation17 [shape = 'u8[65536]{0}', space=vmem, size = 0x10000, scoped, tag = 'input window, operand 9, single buffered']
    #allocation18 [shape = 'u8[65536]{0}', space=vmem, size = 0x10000, scoped, tag = 'input window, operand 10, single buffered']
    #allocation19 [shape = 's32[1]{0}', space=sflag, size = 0x4, scoped, tag = 'scoped memory for tpu_custom_call.1']
    #allocation20 [shape = 'u8[16384]{0}', space=vmem, size = 0x4000, scoped, tag = 'input window, operand 11, single buffered']
    #allocation21 [shape = 'u8[32768]{0}', space=vmem, size = 0x8000, scoped, tag = 'input window, operand 12, single buffered']
    #allocation22 [shape = 's32[1]{0}', space=sflag, size = 0x4, scoped, tag = 'scoped memory for tpu_custom_call.1']
    #allocation23 [shape = 'u8[32768]{0}', space=vmem, size = 0x8000, scoped, tag = 'output window, operand 0']
    #allocation24 [shape = 'u8[65536]{0}', space=vmem, size = 0x10000, scoped, tag = 'output window, operand 1']
    #allocation25 [shape = 's32[2]{0}', space=sflag, size = 0x8, scoped, tag = 'scoped memory for tpu_custom_call.1']
    #allocation26 [shape = 'u8[1024]{0}', space=vmem, size = 0x400, scoped, tag = 'output window, operand 2']
    %22 = vsyncpa [#allocation4], 0
    %s23 = scalar_lea.sflag [#allocation4], 1
    %24 = vsyncpa %s23, 0
    %25 = vsyncpa [#allocation7], 0
    %s26 = scalar_lea.sflag [#allocation7], 1
    %27 = vsyncpa %s26, 0
    %28 = vsyncpa [#allocation10], 0
    %s29 = scalar_lea.sflag [#allocation10], 1
    %30 = vsyncpa %s29, 0
    %31 = vsyncpa [#allocation13], 0
    %32 = vsyncpa [#allocation16], 0
    %33 = vsyncpa [#allocation19], 0
    %34 = vsyncpa [#allocation22], 0
    %35 = vsyncpa [#allocation5], 0
    %s36 = scalar_lea.sflag [#allocation5], 1
    %37 = vsyncpa %s36, 0
    %38 = vsyncpa [#allocation25], 0
    %s39 = scalar_lea.sflag [#allocation25], 1
    %40 = vsyncpa %s39, 0
    loop: start=0, step=1, limit=4
    $region2: #{tpu_custom_call.1} parent=1 // loop_pre_header
      _
    $region3: #{tpu_custom_call.1} parent=1 // loop_header
      %s42 = sphi 0, %s46
      %p43 = scmp.ge.s32.totalorder %s42, 4
      %s52 = sphi 0, %s54
      %s55 = sphi 0, %s52
      %s56 = sphi 0, %s55
      %s72 = sphi 0, %s56
      %s78 = sphi 0, %s80
      %s81 = sphi 0, %s78
      %s82 = sphi 0, %s81
      %s98 = sphi 0, %s82
      %s104 = sphi 0, %s106
      %s107 = sphi 0, %s104
      %s108 = sphi 0, %s107
      %s124 = sphi 0, %s108
      %s130 = sphi 0, %s132
      %s133 = sphi 0, %s130
      %s134 = sphi 0, %s133
      %s150 = sphi 0, %s134
      %s156 = sphi 0, %s158
      %s159 = sphi 0, %s156
      %s160 = sphi 0, %s159
      %s176 = sphi 0, %s160
      %s180 = sphi 0, %s180
      %s182 = sphi 0, %s180
      %s183 = sphi 0, %s182
      %s197 = sphi 0, %s183
      %s201 = sphi 0, %s201
      %s203 = sphi 0, %s201
      %s204 = sphi 0, %s203
      %s218 = sphi 0, %s204
      %s222 = sphi 0, %s222
      %s224 = sphi 0, %s222
      %s225 = sphi 0, %s224
      %s239 = sphi 0, %s225
      %s243 = sphi 0, %s243
      %s245 = sphi 0, %s243
      %s246 = sphi 0, %s245
      %s260 = sphi 0, %s246
      %s264 = sphi 0, %s264
      %s266 = sphi 0, %s264
      %s267 = sphi 0, %s266
      %s281 = sphi 0, %s267
      %s285 = sphi 0, %s285
      %s287 = sphi 0, %s285
      %s288 = sphi 0, %s287
      %s302 = sphi 0, %s288
      %s306 = sphi 0, %s306
      %s308 = sphi 0, %s306
      %s309 = sphi 0, %s308
      %s323 = sphi 0, %s309
      %s327 = sphi 0, %s327
      %s329 = sphi 0, %s327
      %s330 = sphi 0, %s329
      %s344 = sphi 0, %s330
      %s350 = sphi 0, %s352
      %s353 = sphi 0, %s350
      %s354 = sphi 0, %s353
      %s370 = sphi 0, %s354
      %s376 = sphi 0, %s378
      %s379 = sphi 0, %s376
      %s380 = sphi 0, %s379
      %s396 = sphi 0, %s380
      %s402 = sphi 0, %s404
      %s405 = sphi 0, %s402
      %s406 = sphi 0, %s405
      %s422 = sphi 0, %s406
    $region4: #{tpu_custom_call.1} parent=1 // loop_header_branch
      %45 = sbr.rel (%p43) target = $region8
    $region5: #{tpu_custom_call.1} parent=1 // loop_body
      %s47 = ssub.s32 %s42, 1
      %s48 = ssub.s32 %s42, 2
      %s49 = sadd.s32 %s42, 1
      %s50 = ssub.s32 %s42, %s49
      %p51 = scmp.eq.s32.totalorder %s50, 0
      %s53 = sadd.s32 %s52, 1
      %s54 = scalar_select %p51, %s52, %s53
      %p57 = pneg %p51
      %p58 = scmp.eq.s32.totalorder %s42, 1
      %p59 = por %p57, %p58
      %p60 = scmp.ne.s32.totalorder %s52, %s55
      %p61 = scmp.eq.s32.totalorder %s42, 0
      %p62 = por %p60, %p61
      %p63 = scmp.ne.s32.totalorder %s52, %s55
      %p64 = scmp.eq.s32.totalorder %s47, 1
      %p65 = por %p63, %p64
      %p66 = scmp.ne.s32.totalorder %s55, %s56
      %p67 = scmp.eq.s32.totalorder %s47, 0
      %p68 = por %p66, %p67
      %p69 = scmp.ne.s32.totalorder %s55, %s56
      %p70 = scmp.eq.s32.totalorder %s48, 1
      %p71 = por %p69, %p70
      %p73 = scmp.ne.s32.totalorder %s56, %s72
      %p74 = scmp.eq.s32.totalorder %s48, 0
      %p75 = por %p73, %p74
      %s76 = ssub.s32 %s42, %s49
      %p77 = scmp.eq.s32.totalorder %s76, 0
      %s79 = sadd.s32 %s78, 1
      %s80 = scalar_select %p77, %s78, %s79
      %p83 = pneg %p77
      %p84 = scmp.eq.s32.totalorder %s42, 1
      %p85 = por %p83, %p84
      %p86 = scmp.ne.s32.totalorder %s78, %s81
      %p87 = scmp.eq.s32.totalorder %s42, 0
      %p88 = por %p86, %p87
      %p89 = scmp.ne.s32.totalorder %s78, %s81
      %p90 = scmp.eq.s32.totalorder %s47, 1
      %p91 = por %p89, %p90
      %p92 = scmp.ne.s32.totalorder %s81, %s82
      %p93 = scmp.eq.s32.totalorder %s47, 0
      %p94 = por %p92, %p93
      %p95 = scmp.ne.s32.totalorder %s81, %s82
      %p96 = scmp.eq.s32.totalorder %s48, 1
      %p97 = por %p95, %p96
      %p99 = scmp.ne.s32.totalorder %s82, %s98
      %p100 = scmp.eq.s32.totalorder %s48, 0
      %p101 = por %p99, %p100
      %s102 = ssub.s32 %s42, %s49
      %p103 = scmp.eq.s32.totalorder %s102, 0
      %s105 = sadd.s32 %s104, 1
      %s106 = scalar_select %p103, %s104, %s105
      %p109 = pneg %p103
      %p110 = scmp.eq.s32.totalorder %s42, 1
      %p111 = por %p109, %p110
      %p112 = scmp.ne.s32.totalorder %s104, %s107
      %p113 = scmp.eq.s32.totalorder %s42, 0
      %p114 = por %p112, %p113
      %p115 = scmp.ne.s32.totalorder %s104, %s107
      %p116 = scmp.eq.s32.totalorder %s47, 1
      %p117 = por %p115, %p116
      %p118 = scmp.ne.s32.totalorder %s107, %s108
      %p119 = scmp.eq.s32.totalorder %s47, 0
      %p120 = por %p118, %p119
      %p121 = scmp.ne.s32.totalorder %s107, %s108
      %p122 = scmp.eq.s32.totalorder %s48, 1
      %p123 = por %p121, %p122
      %p125 = scmp.ne.s32.totalorder %s108, %s124
      %p126 = scmp.eq.s32.totalorder %s48, 0
      %p127 = por %p125, %p126
      %s128 = ssub.s32 %s42, %s49
      %p129 = scmp.eq.s32.totalorder %s128, 0
      %s131 = sadd.s32 %s130, 1
      %s132 = scalar_select %p129, %s130, %s131
      %p135 = pneg %p129
      %p136 = scmp.eq.s32.totalorder %s42, 1
      %p137 = por %p135, %p136
      %p138 = scmp.ne.s32.totalorder %s130, %s133
      %p139 = scmp.eq.s32.totalorder %s42, 0
      %p140 = por %p138, %p139
      %p141 = scmp.ne.s32.totalorder %s130, %s133
      %p142 = scmp.eq.s32.totalorder %s47, 1
      %p143 = por %p141, %p142
      %p144 = scmp.ne.s32.totalorder %s133, %s134
      %p145 = scmp.eq.s32.totalorder %s47, 0
      %p146 = por %p144, %p145
      %p147 = scmp.ne.s32.totalorder %s133, %s134
      %p148 = scmp.eq.s32.totalorder %s48, 1
      %p149 = por %p147, %p148
      %p151 = scmp.ne.s32.totalorder %s134, %s150
      %p152 = scmp.eq.s32.totalorder %s48, 0
      %p153 = por %p151, %p152
      %s154 = ssub.s32 %s42, %s49
      %p155 = scmp.eq.s32.totalorder %s154, 0
      %s157 = sadd.s32 %s156, 1
      %s158 = scalar_select %p155, %s156, %s157
      %p161 = pneg %p155
      %p162 = scmp.eq.s32.totalorder %s42, 1
      %p163 = por %p161, %p162
      %p164 = scmp.ne.s32.totalorder %s156, %s159
      %p165 = scmp.eq.s32.totalorder %s42, 0
      %p166 = por %p164, %p165
      %p167 = scmp.ne.s32.totalorder %s156, %s159
      %p168 = scmp.eq.s32.totalorder %s47, 1
      %p169 = por %p167, %p168
      %p170 = scmp.ne.s32.totalorder %s159, %s160
      %p171 = scmp.eq.s32.totalorder %s47, 0
      %p172 = por %p170, %p171
      %p173 = scmp.ne.s32.totalorder %s159, %s160
      %p174 = scmp.eq.s32.totalorder %s48, 1
      %p175 = por %p173, %p174
      %p177 = scmp.ne.s32.totalorder %s160, %s176
      %p178 = scmp.eq.s32.totalorder %s48, 0
      %p179 = por %p177, %p178
      %s181 = sadd.s32 %s180, 1
      %p184 = scmp.eq.s32.totalorder %s42, 1
      %p185 = scmp.ne.s32.totalorder %s180, %s182
      %p186 = scmp.eq.s32.totalorder %s42, 0
      %p187 = por %p185, %p186
      %p188 = scmp.ne.s32.totalorder %s180, %s182
      %p189 = scmp.eq.s32.totalorder %s47, 1
      %p190 = por %p188, %p189
      %p191 = scmp.ne.s32.totalorder %s182, %s183
      %p192 = scmp.eq.s32.totalorder %s47, 0
      %p193 = por %p191, %p192
      %p194 = scmp.ne.s32.totalorder %s182, %s183
      %p195 = scmp.eq.s32.totalorder %s48, 1
      %p196 = por %p194, %p195
      %p198 = scmp.ne.s32.totalorder %s183, %s197
      %p199 = scmp.eq.s32.totalorder %s48, 0
      %p200 = por %p198, %p199
      %s202 = sadd.s32 %s201, 1
      %p205 = scmp.eq.s32.totalorder %s42, 1
      %p206 = scmp.ne.s32.totalorder %s201, %s203
      %p207 = scmp.eq.s32.totalorder %s42, 0
      %p208 = por %p206, %p207
      %p209 = scmp.ne.s32.totalorder %s201, %s203
      %p210 = scmp.eq.s32.totalorder %s47, 1
      %p211 = por %p209, %p210
      %p212 = scmp.ne.s32.totalorder %s203, %s204
      %p213 = scmp.eq.s32.totalorder %s47, 0
      %p214 = por %p212, %p213
      %p215 = scmp.ne.s32.totalorder %s203, %s204
      %p216 = scmp.eq.s32.totalorder %s48, 1
      %p217 = por %p215, %p216
      %p219 = scmp.ne.s32.totalorder %s204, %s218
      %p220 = scmp.eq.s32.totalorder %s48, 0
      %p221 = por %p219, %p220
      %s223 = sadd.s32 %s222, 1
      %p226 = scmp.eq.s32.totalorder %s42, 1
      %p227 = scmp.ne.s32.totalorder %s222, %s224
      %p228 = scmp.eq.s32.totalorder %s42, 0
      %p229 = por %p227, %p228
      %p230 = scmp.ne.s32.totalorder %s222, %s224
      %p231 = scmp.eq.s32.totalorder %s47, 1
      %p232 = por %p230, %p231
      %p233 = scmp.ne.s32.totalorder %s224, %s225
      %p234 = scmp.eq.s32.totalorder %s47, 0
      %p235 = por %p233, %p234
      %p236 = scmp.ne.s32.totalorder %s224, %s225
      %p237 = scmp.eq.s32.totalorder %s48, 1
      %p238 = por %p236, %p237
      %p240 = scmp.ne.s32.totalorder %s225, %s239
      %p241 = scmp.eq.s32.totalorder %s48, 0
      %p242 = por %p240, %p241
      %s244 = sadd.s32 %s243, 1
      %p247 = scmp.eq.s32.totalorder %s42, 1
      %p248 = scmp.ne.s32.totalorder %s243, %s245
      %p249 = scmp.eq.s32.totalorder %s42, 0
      %p250 = por %p248, %p249
      %p251 = scmp.ne.s32.totalorder %s243, %s245
      %p252 = scmp.eq.s32.totalorder %s47, 1
      %p253 = por %p251, %p252
      %p254 = scmp.ne.s32.totalorder %s245, %s246
      %p255 = scmp.eq.s32.totalorder %s47, 0
      %p256 = por %p254, %p255
      %p257 = scmp.ne.s32.totalorder %s245, %s246
      %p258 = scmp.eq.s32.totalorder %s48, 1
      %p259 = por %p257, %p258
      %p261 = scmp.ne.s32.totalorder %s246, %s260
      %p262 = scmp.eq.s32.totalorder %s48, 0
      %p263 = por %p261, %p262
      %s265 = sadd.s32 %s264, 1
      %p268 = scmp.eq.s32.totalorder %s42, 1
      %p269 = scmp.ne.s32.totalorder %s264, %s266
      %p270 = scmp.eq.s32.totalorder %s42, 0
      %p271 = por %p269, %p270
      %p272 = scmp.ne.s32.totalorder %s264, %s266
      %p273 = scmp.eq.s32.totalorder %s47, 1
      %p274 = por %p272, %p273
      %p275 = scmp.ne.s32.totalorder %s266, %s267
      %p276 = scmp.eq.s32.totalorder %s47, 0
      %p277 = por %p275, %p276
      %p278 = scmp.ne.s32.totalorder %s266, %s267
      %p279 = scmp.eq.s32.totalorder %s48, 1
      %p280 = por %p278, %p279
      %p282 = scmp.ne.s32.totalorder %s267, %s281
      %p283 = scmp.eq.s32.totalorder %s48, 0
      %p284 = por %p282, %p283
      %s286 = sadd.s32 %s285, 1
      %p289 = scmp.eq.s32.totalorder %s42, 1
      %p290 = scmp.ne.s32.totalorder %s285, %s287
      %p291 = scmp.eq.s32.totalorder %s42, 0
      %p292 = por %p290, %p291
      %p293 = scmp.ne.s32.totalorder %s285, %s287
      %p294 = scmp.eq.s32.totalorder %s47, 1
      %p295 = por %p293, %p294
      %p296 = scmp.ne.s32.totalorder %s287, %s288
      %p297 = scmp.eq.s32.totalorder %s47, 0
      %p298 = por %p296, %p297
      %p299 = scmp.ne.s32.totalorder %s287, %s288
      %p300 = scmp.eq.s32.totalorder %s48, 1
      %p301 = por %p299, %p300
      %p303 = scmp.ne.s32.totalorder %s288, %s302
      %p304 = scmp.eq.s32.totalorder %s48, 0
      %p305 = por %p303, %p304
      %s307 = sadd.s32 %s306, 1
      %p310 = scmp.eq.s32.totalorder %s42, 1
      %p311 = scmp.ne.s32.totalorder %s306, %s308
      %p312 = scmp.eq.s32.totalorder %s42, 0
      %p313 = por %p311, %p312
      %p314 = scmp.ne.s32.totalorder %s306, %s308
      %p315 = scmp.eq.s32.totalorder %s47, 1
      %p316 = por %p314, %p315
      %p317 = scmp.ne.s32.totalorder %s308, %s309
      %p318 = scmp.eq.s32.totalorder %s47, 0
      %p319 = por %p317, %p318
      %p320 = scmp.ne.s32.totalorder %s308, %s309
      %p321 = scmp.eq.s32.totalorder %s48, 1
      %p322 = por %p320, %p321
      %p324 = scmp.ne.s32.totalorder %s309, %s323
      %p325 = scmp.eq.s32.totalorder %s48, 0
      %p326 = por %p324, %p325
      %s328 = sadd.s32 %s327, 1
      %p331 = scmp.eq.s32.totalorder %s42, 1
      %p332 = scmp.ne.s32.totalorder %s327, %s329
      %p333 = scmp.eq.s32.totalorder %s42, 0
      %p334 = por %p332, %p333
      %p335 = scmp.ne.s32.totalorder %s327, %s329
      %p336 = scmp.eq.s32.totalorder %s47, 1
      %p337 = por %p335, %p336
      %p338 = scmp.ne.s32.totalorder %s329, %s330
      %p339 = scmp.eq.s32.totalorder %s47, 0
      %p340 = por %p338, %p339
      %p341 = scmp.ne.s32.totalorder %s329, %s330
      %p342 = scmp.eq.s32.totalorder %s48, 1
      %p343 = por %p341, %p342
      %p345 = scmp.ne.s32.totalorder %s330, %s344
      %p346 = scmp.eq.s32.totalorder %s48, 0
      %p347 = por %p345, %p346
      %s348 = ssub.s32 %s42, %s49
      %p349 = scmp.eq.s32.totalorder %s348, 0
      %s351 = sadd.s32 %s350, 1
      %s352 = scalar_select %p349, %s350, %s351
      %p355 = pneg %p349
      %p356 = scmp.eq.s32.totalorder %s42, 1
      %p357 = por %p355, %p356
      %p358 = scmp.ne.s32.totalorder %s350, %s353
      %p359 = scmp.eq.s32.totalorder %s42, 0
      %p360 = por %p358, %p359
      %p361 = scmp.ne.s32.totalorder %s350, %s353
      %p362 = scmp.eq.s32.totalorder %s47, 1
      %p363 = por %p361, %p362
      %p364 = scmp.ne.s32.totalorder %s353, %s354
      %p365 = scmp.eq.s32.totalorder %s47, 0
      %p366 = por %p364, %p365
      %p367 = scmp.ne.s32.totalorder %s353, %s354
      %p368 = scmp.eq.s32.totalorder %s48, 1
      %p369 = por %p367, %p368
      %p371 = scmp.ne.s32.totalorder %s354, %s370
      %p372 = scmp.eq.s32.totalorder %s48, 0
      %p373 = por %p371, %p372
      %s374 = ssub.s32 %s42, %s49
      %p375 = scmp.eq.s32.totalorder %s374, 0
      %s377 = sadd.s32 %s376, 1
      %s378 = scalar_select %p375, %s376, %s377
      %p381 = pneg %p375
      %p382 = scmp.eq.s32.totalorder %s42, 1
      %p383 = por %p381, %p382
      %p384 = scmp.ne.s32.totalorder %s376, %s379
      %p385 = scmp.eq.s32.totalorder %s42, 0
      %p386 = por %p384, %p385
      %p387 = scmp.ne.s32.totalorder %s376, %s379
      %p388 = scmp.eq.s32.totalorder %s47, 1
      %p389 = por %p387, %p388
      %p390 = scmp.ne.s32.totalorder %s379, %s380
      %p391 = scmp.eq.s32.totalorder %s47, 0
      %p392 = por %p390, %p391
      %p393 = scmp.ne.s32.totalorder %s379, %s380
      %p394 = scmp.eq.s32.totalorder %s48, 1
      %p395 = por %p393, %p394
      %p397 = scmp.ne.s32.totalorder %s380, %s396
      %p398 = scmp.eq.s32.totalorder %s48, 0
      %p399 = por %p397, %p398
      %s400 = ssub.s32 %s42, %s49
      %p401 = scmp.eq.s32.totalorder %s400, 0
      %s403 = sadd.s32 %s402, 1
      %s404 = scalar_select %p401, %s402, %s403
      %p407 = pneg %p401
      %p408 = scmp.eq.s32.totalorder %s42, 1
      %p409 = por %p407, %p408
      %p410 = scmp.ne.s32.totalorder %s402, %s405
      %p411 = scmp.eq.s32.totalorder %s42, 0
      %p412 = por %p410, %p411
      %p413 = scmp.ne.s32.totalorder %s402, %s405
      %p414 = scmp.eq.s32.totalorder %s47, 1
      %p415 = por %p413, %p414
      %p416 = scmp.ne.s32.totalorder %s405, %s406
      %p417 = scmp.eq.s32.totalorder %s47, 0
      %p418 = por %p416, %p417
      %p419 = scmp.ne.s32.totalorder %s405, %s406
      %p420 = scmp.eq.s32.totalorder %s48, 1
      %p421 = por %p419, %p420
      %p423 = scmp.ne.s32.totalorder %s406, %s422
      %p424 = scmp.eq.s32.totalorder %s48, 0
      %p425 = por %p423, %p424
      %p426 = scmp.le.s32.totalorder 1, %s42
      %p427 = scmp.lt.s32.totalorder %s42, 3
      %p428 = pnand %p426, %p427
      %p429 = pneg %p428
      // Predicated region
      $region9: #{tpu_custom_call.1} parent=5 // pred_check
        _
      $region10: #{tpu_custom_call.1} parent=5 // pred_check_branch
        %431 = sbr.rel (%p428) target = $region12
      $region11: #{tpu_custom_call.1} parent=5 // pred_region
        %s432 = ssub.s32 %s42, 1
        // Predicated region
        $region13: #{tpu_custom_call.1} parent=11 // pred_check
          %p433 = pneg %p193
        $region14: #{tpu_custom_call.1} parent=11 // pred_check_branch
          %435 = sbr.rel (%p433) target = $region16
        $region15: #{tpu_custom_call.1} parent=11 // pred_region
          %s437 = ssub.s32 512, 512
          %438 = vsyncadd [#allocation13], %s437
          %s439 = sshll.u32 [#allocation12], 4
          %s440 = int_to_ptr.vmem [resolvable:$true] %s439
          %445 = dma.hbm_to_vmem [thread:$0]  %s5, 512, %s440, [#allocation13], 128, 128, 8
        $region16: #{tpu_custom_call.1} parent=11 // pred_fallthru
          _
        // Predicated region
        $region17: #{tpu_custom_call.1} parent=11 // pred_check
          %p446 = pneg %p214
        $region18: #{tpu_custom_call.1} parent=11 // pred_check_branch
          %448 = sbr.rel (%p446) target = $region20
        $region19: #{tpu_custom_call.1} parent=11 // pred_region
          %s450 = ssub.s32 512, 512
          %451 = vsyncadd [#allocation13], %s450
          %s452 = sshll.u32 [#allocation14], 4
          %s453 = int_to_ptr.vmem [resolvable:$true] %s452
          %458 = dma.hbm_to_vmem [thread:$0]  %s6, 512, %s453, [#allocation13], 128, 128, 8
        $region20: #{tpu_custom_call.1} parent=11 // pred_fallthru
          _
        // Predicated region
        $region21: #{tpu_custom_call.1} parent=11 // pred_check
          %p459 = pneg %p235
        $region22: #{tpu_custom_call.1} parent=11 // pred_check_branch
          %461 = sbr.rel (%p459) target = $region24
        $region23: #{tpu_custom_call.1} parent=11 // pred_region
          %s463 = ssub.s32 512, 512
          %464 = vsyncadd [#allocation16], %s463
          %s465 = sshll.u32 [#allocation15], 4
          %s466 = int_to_ptr.vmem [resolvable:$true] %s465
          %471 = dma.hbm_to_vmem [thread:$0]  %s7, 512, %s466, [#allocation16], 128, 128, 8
        $region24: #{tpu_custom_call.1} parent=11 // pred_fallthru
          _
        // Predicated region
        $region25: #{tpu_custom_call.1} parent=11 // pred_check
          %p472 = pneg %p256
        $region26: #{tpu_custom_call.1} parent=11 // pred_check_branch
          %474 = sbr.rel (%p472) target = $region28
        $region27: #{tpu_custom_call.1} parent=11 // pred_region
          _
        $region28: #{tpu_custom_call.1} parent=11 // pred_fallthru
          _
        // Predicated region
        $region29: #{tpu_custom_call.1} parent=11 // pred_check
          %p475 = pneg %p277
        $region30: #{tpu_custom_call.1} parent=11 // pred_check_branch
          %477 = sbr.rel (%p475) target = $region32
        $region31: #{tpu_custom_call.1} parent=11 // pred_region
          %s479 = ssub.s32 2048, 2048
          %480 = vsyncadd [#allocation16], %s479
          %s481 = sshll.u32 [#allocation17], 4
          %s482 = int_to_ptr.vmem [resolvable:$true] %s481
          %487 = dma.hbm_to_vmem [thread:$0]  %s9, 2048, %s482, [#allocation16], 128, 128, 8
        $region32: #{tpu_custom_call.1} parent=11 // pred_fallthru
          _
        // Predicated region
        $region33: #{tpu_custom_call.1} parent=11 // pred_check
          %p488 = pneg %p298
        $region34: #{tpu_custom_call.1} parent=11 // pred_check_branch
          %490 = sbr.rel (%p488) target = $region36
        $region35: #{tpu_custom_call.1} parent=11 // pred_region
          %s492 = ssub.s32 2048, 2048
          %493 = vsyncadd [#allocation19], %s492
          %s494 = sshll.u32 [#allocation18], 4
          %s495 = int_to_ptr.vmem [resolvable:$true] %s494
          %500 = dma.hbm_to_vmem [thread:$0]  %s10, 2048, %s495, [#allocation19], 128, 128, 8
        $region36: #{tpu_custom_call.1} parent=11 // pred_fallthru
          _
        // Predicated region
        $region37: #{tpu_custom_call.1} parent=11 // pred_check
          %p501 = pneg %p319
        $region38: #{tpu_custom_call.1} parent=11 // pred_check_branch
          %503 = sbr.rel (%p501) target = $region40
        $region39: #{tpu_custom_call.1} parent=11 // pred_region
          %s505 = ssub.s32 512, 512
          %506 = vsyncadd [#allocation19], %s505
          %s507 = sshll.u32 [#allocation20], 4
          %s508 = int_to_ptr.vmem [resolvable:$true] %s507
          %513 = dma.hbm_to_vmem [thread:$0]  %s11, 512, %s508, [#allocation19], 64, 64, 4
        $region40: #{tpu_custom_call.1} parent=11 // pred_fallthru
          _
        // Predicated region
        $region41: #{tpu_custom_call.1} parent=11 // pred_check
          %p514 = pneg %p340
        $region42: #{tpu_custom_call.1} parent=11 // pred_check_branch
          %516 = sbr.rel (%p514) target = $region44
        $region43: #{tpu_custom_call.1} parent=11 // pred_region
          %s518 = ssub.s32 1024, 1024
          %519 = vsyncadd [#allocation22], %s518
          %s520 = sshll.u32 [#allocation21], 4
          %s521 = int_to_ptr.vmem [resolvable:$true] %s520
          %526 = dma.hbm_to_vmem [thread:$0]  %s12, 1024, %s521, [#allocation22], 128, 128, 8
        $region44: #{tpu_custom_call.1} parent=11 // pred_fallthru
          _
      $region12: #{tpu_custom_call.1} parent=5 // pred_fallthru
        _
      %p527 = scmp.lt.s32.totalorder %s42, 2
      // Predicated region
      $region45: #{tpu_custom_call.1} parent=5 // pred_check
        %p528 = pneg %p527
      $region46: #{tpu_custom_call.1} parent=5 // pred_check_branch
        %530 = sbr.rel (%p528) target = $region48
      $region47: #{tpu_custom_call.1} parent=5 // pred_region
        // Predicated region
        $region49: #{tpu_custom_call.1} parent=47 // pred_check
          %p531 = pneg %p62
        $region50: #{tpu_custom_call.1} parent=47 // pred_check_branch
          %533 = sbr.rel (%p531) target = $region52
        $region51: #{tpu_custom_call.1} parent=47 // pred_region
          %s534 = sand.u32 %s52, 1
          %s535 = scalar_lea.sflag [#allocation4], %s534
          %s536 = sand.u32 %s52, 1
          %s537 = smul.addr %s536, 32
          %s538 = scalar_lea.vmem [#allocation3], %s537
          %s540 = ssub.s32 512, 512
          %541 = vsyncadd %s535, %s540
          %s542 = smul.addr %s42, 8
          %s543 = smul.addr %s542, 64
          %s544 = scalar_lea.hbm %s0, %s543
          %s545 = sshll.u32 %s538, 4
          %s546 = int_to_ptr.vmem [resolvable:$true] %s545
          %551 = dma.hbm_to_vmem [thread:$0]  %s544, 512, %s546, %s535, 64, 64, 4
        $region52: #{tpu_custom_call.1} parent=47 // pred_fallthru
          _
        // Predicated region
        $region53: #{tpu_custom_call.1} parent=47 // pred_check
          %p552 = pneg %p88
        $region54: #{tpu_custom_call.1} parent=47 // pred_check_branch
          %554 = sbr.rel (%p552) target = $region56
        $region55: #{tpu_custom_call.1} parent=47 // pred_region
          %s555 = sand.u32 %s42, 1
          %s556 = scalar_lea.sflag [#allocation7], %s555
          %s557 = sand.u32 %s78, 1
          %s558 = smul.addr %s557, 8
          %s559 = scalar_lea.vmem [#allocation6], %s558
          %s561 = ssub.s32 128, 128
          %562 = vsyncadd %s556, %s561
          %s563 = smul.addr %s42, 128
          %s564 = scalar_lea.hbm %s1, %s563
          %s566 = sshll.u32 %s559, 4
          %s567 = int_to_ptr.vmem [resolvable:$true] %s566
          %569 = dma.hbm_to_vmem [thread:$0]  %s564, 128, %s567, %s556
        $region56: #{tpu_custom_call.1} parent=47 // pred_fallthru
          _
        // Predicated region
        $region57: #{tpu_custom_call.1} parent=47 // pred_check
          %p570 = pneg %p114
        $region58: #{tpu_custom_call.1} parent=47 // pred_check_branch
          %572 = sbr.rel (%p570) target = $region60
        $region59: #{tpu_custom_call.1} parent=47 // pred_region
          %s573 = sand.u32 %s42, 1
          %s574 = scalar_lea.sflag [#allocation7], %s573
          %s575 = sand.u32 %s104, 1
          %s576 = smul.addr %s575, 64
          %s577 = scalar_lea.vmem [#allocation8], %s576
          %s579 = ssub.s32 1024, 1024
          %580 = vsyncadd %s574, %s579
          %s581 = smul.addr %s42, 8
          %s582 = smul.addr %s581, 128
          %s583 = scalar_lea.hbm %s2, %s582
          %s584 = sshll.u32 %s577, 4
          %s585 = int_to_ptr.vmem [resolvable:$true] %s584
          %590 = dma.hbm_to_vmem [thread:$0]  %s583, 1024, %s585, %s574, 128, 128, 8
        $region60: #{tpu_custom_call.1} parent=47 // pred_fallthru
          _
        // Predicated region
        $region61: #{tpu_custom_call.1} parent=47 // pred_check
          %p591 = pneg %p140
        $region62: #{tpu_custom_call.1} parent=47 // pred_check_branch
          %593 = sbr.rel (%p591) target = $region64
        $region63: #{tpu_custom_call.1} parent=47 // pred_region
          %s594 = sand.u32 %s42, 1
          %s595 = scalar_lea.sflag [#allocation10], %s594
          %s596 = sand.u32 %s130, 1
          %s597 = scalar_lea.vmem [#allocation9], %s596
          %s599 = ssub.s32 16, 16
          %600 = vsyncadd %s595, %s599
          %s601 = smul.addr %s42, 16
          %s602 = scalar_lea.hbm %s3, %s601
          %s604 = sshll.u32 %s597, 4
          %s605 = int_to_ptr.vmem [resolvable:$true] %s604
          %607 = dma.hbm_to_vmem [thread:$0]  %s602, 16, %s605, %s595
        $region64: #{tpu_custom_call.1} parent=47 // pred_fallthru
          _
        // Predicated region
        $region65: #{tpu_custom_call.1} parent=47 // pred_check
          %p608 = pneg %p166
        $region66: #{tpu_custom_call.1} parent=47 // pred_check_branch
          %610 = sbr.rel (%p608) target = $region68
        $region67: #{tpu_custom_call.1} parent=47 // pred_region
          %s611 = sand.u32 %s42, 1
          %s612 = scalar_lea.sflag [#allocation10], %s611
          %s613 = sand.u32 %s156, 1
          %s614 = scalar_lea.vmem [#allocation11], %s613
          %s616 = ssub.s32 16, 16
          %617 = vsyncadd %s612, %s616
          %s618 = smul.addr %s42, 16
          %s619 = scalar_lea.hbm %s4, %s618
          %s621 = sshll.u32 %s614, 4
          %s622 = int_to_ptr.vmem [resolvable:$true] %s621
          %624 = dma.hbm_to_vmem [thread:$0]  %s619, 16, %s622, %s612
        $region68: #{tpu_custom_call.1} parent=47 // pred_fallthru
          _
      $region48: #{tpu_custom_call.1} parent=5 // pred_fallthru
        _
      %p625 = scmp.le.s32.totalorder 1, %s42
      %p626 = scmp.lt.s32.totalorder %s42, 3
      %p627 = pnand %p625, %p626
      %p628 = pneg %p627
      // Predicated region
      $region69: #{tpu_custom_call.1} parent=5 // pred_check
        _
      $region70: #{tpu_custom_call.1} parent=5 // pred_check_branch
        %630 = sbr.rel (%p627) target = $region72
      $region71: #{tpu_custom_call.1} parent=5 // pred_region
        %s631 = ssub.s32 %s42, 1
        %s632 = sand.u32 %s55, 1
        %s633 = scalar_lea.sflag [#allocation4], %s632
        %s634 = sand.u32 %s55, 1
        %s635 = smul.addr %s634, 32
        %s636 = scalar_lea.vmem [#allocation3], %s635
        // Predicated region
        $region73: #{tpu_custom_call.1} parent=71 // pred_check
          %p637 = pneg %p68
        $region74: #{tpu_custom_call.1} parent=71 // pred_check_branch
          %639 = sbr.rel (%p637) target = $region76
        $region75: #{tpu_custom_call.1} parent=71 // pred_region
          %640 = dma.done %s633, 512
        $region76: #{tpu_custom_call.1} parent=71 // pred_fallthru
          _
        %s641 = sand.u32 %s47, 1
        %s642 = scalar_lea.sflag [#allocation7], %s641
        %s643 = sand.u32 %s81, 1
        %s644 = smul.addr %s643, 8
        %s645 = scalar_lea.vmem [#allocation6], %s644
        // Predicated region
        $region77: #{tpu_custom_call.1} parent=71 // pred_check
          %p646 = pneg %p94
        $region78: #{tpu_custom_call.1} parent=71 // pred_check_branch
          %648 = sbr.rel (%p646) target = $region80
        $region79: #{tpu_custom_call.1} parent=71 // pred_region
          %649 = dma.done %s642, 128
        $region80: #{tpu_custom_call.1} parent=71 // pred_fallthru
          _
        %s650 = sand.u32 %s47, 1
        %s651 = scalar_lea.sflag [#allocation7], %s650
        %s652 = sand.u32 %s107, 1
        %s653 = smul.addr %s652, 64
        %s654 = scalar_lea.vmem [#allocation8], %s653
        // Predicated region
        $region81: #{tpu_custom_call.1} parent=71 // pred_check
          %p655 = pneg %p120
        $region82: #{tpu_custom_call.1} parent=71 // pred_check_branch
          %657 = sbr.rel (%p655) target = $region84
        $region83: #{tpu_custom_call.1} parent=71 // pred_region
          %658 = dma.done %s651, 1024
        $region84: #{tpu_custom_call.1} parent=71 // pred_fallthru
          _
        %s659 = sand.u32 %s47, 1
        %s660 = scalar_lea.sflag [#allocation10], %s659
        %s661 = sand.u32 %s133, 1
        %s662 = scalar_lea.vmem [#allocation9], %s661
        // Predicated region
        $region85: #{tpu_custom_call.1} parent=71 // pred_check
          %p663 = pneg %p146
        $region86: #{tpu_custom_call.1} parent=71 // pred_check_branch
          %665 = sbr.rel (%p663) target = $region88
        $region87: #{tpu_custom_call.1} parent=71 // pred_region
          %666 = dma.done %s660, 16
        $region88: #{tpu_custom_call.1} parent=71 // pred_fallthru
          _
        %s667 = sand.u32 %s47, 1
        %s668 = scalar_lea.sflag [#allocation10], %s667
        %s669 = sand.u32 %s159, 1
        %s670 = scalar_lea.vmem [#allocation11], %s669
        // Predicated region
        $region89: #{tpu_custom_call.1} parent=71 // pred_check
          %p671 = pneg %p172
        $region90: #{tpu_custom_call.1} parent=71 // pred_check_branch
          %673 = sbr.rel (%p671) target = $region92
        $region91: #{tpu_custom_call.1} parent=71 // pred_region
          %674 = dma.done %s668, 16
        $region92: #{tpu_custom_call.1} parent=71 // pred_fallthru
          _
        // Predicated region
        $region93: #{tpu_custom_call.1} parent=71 // pred_check
          %p675 = pneg %p193
        $region94: #{tpu_custom_call.1} parent=71 // pred_check_branch
          %677 = sbr.rel (%p675) target = $region96
        $region95: #{tpu_custom_call.1} parent=71 // pred_region
          %678 = dma.done [#allocation13], 512
        $region96: #{tpu_custom_call.1} parent=71 // pred_fallthru
          _
        // Predicated region
        $region97: #{tpu_custom_call.1} parent=71 // pred_check
          %p679 = pneg %p214
        $region98: #{tpu_custom_call.1} parent=71 // pred_check_branch
          %681 = sbr.rel (%p679) target = $region100
        $region99: #{tpu_custom_call.1} parent=71 // pred_region
          %682 = dma.done [#allocation13], 512
        $region100: #{tpu_custom_call.1} parent=71 // pred_fallthru
          _
        // Predicated region
        $region101: #{tpu_custom_call.1} parent=71 // pred_check
          %p683 = pneg %p235
        $region102: #{tpu_custom_call.1} parent=71 // pred_check_branch
          %685 = sbr.rel (%p683) target = $region104
        $region103: #{tpu_custom_call.1} parent=71 // pred_region
          %686 = dma.done [#allocation16], 512
        $region104: #{tpu_custom_call.1} parent=71 // pred_fallthru
          _
        // Predicated region
        $region105: #{tpu_custom_call.1} parent=71 // pred_check
          %p687 = pneg %p277
        $region106: #{tpu_custom_call.1} parent=71 // pred_check_branch
          %689 = sbr.rel (%p687) target = $region108
        $region107: #{tpu_custom_call.1} parent=71 // pred_region
          %690 = dma.done [#allocation16], 2048
        $region108: #{tpu_custom_call.1} parent=71 // pred_fallthru
          _
        // Predicated region
        $region109: #{tpu_custom_call.1} parent=71 // pred_check
          %p691 = pneg %p298
        $region110: #{tpu_custom_call.1} parent=71 // pred_check_branch
          %693 = sbr.rel (%p691) target = $region112
        $region111: #{tpu_custom_call.1} parent=71 // pred_region
          %694 = dma.done [#allocation19], 2048
        $region112: #{tpu_custom_call.1} parent=71 // pred_fallthru
          _
        // Predicated region
        $region113: #{tpu_custom_call.1} parent=71 // pred_check
          %p695 = pneg %p319
        $region114: #{tpu_custom_call.1} parent=71 // pred_check_branch
          %697 = sbr.rel (%p695) target = $region116
        $region115: #{tpu_custom_call.1} parent=71 // pred_region
          %698 = dma.done [#allocation19], 512
        $region116: #{tpu_custom_call.1} parent=71 // pred_fallthru
          _
        // Predicated region
        $region117: #{tpu_custom_call.1} parent=71 // pred_check
          %p699 = pneg %p340
        $region118: #{tpu_custom_call.1} parent=71 // pred_check_branch
          %701 = sbr.rel (%p699) target = $region120
        $region119: #{tpu_custom_call.1} parent=71 // pred_region
          %702 = dma.done [#allocation22], 1024
        $region120: #{tpu_custom_call.1} parent=71 // pred_fallthru
          _
        %s703 = sand.u32 %s55, 1
        %s704 = scalar_lea.sflag [#allocation4], %s703
        %s705 = sand.u32 %s55, 1
        %s706 = smul.addr %s705, 32
        %s707 = scalar_lea.vmem [#allocation3], %s706
        %p708 = pneg %p68
        %p709 = pneg %p65
        %s710 = sand.u32 %s47, 1
        %s711 = scalar_lea.sflag [#allocation7], %s710
        %s712 = sand.u32 %s81, 1
        %s713 = smul.addr %s712, 8
        %s714 = scalar_lea.vmem [#allocation6], %s713
        %p715 = pneg %p94
        %p716 = pneg %p91
        %s717 = sand.u32 %s47, 1
        %s718 = scalar_lea.sflag [#allocation7], %s717
        %s719 = sand.u32 %s107, 1
        %s720 = smul.addr %s719, 64
        %s721 = scalar_lea.vmem [#allocation8], %s720
        %p722 = pneg %p120
        %p723 = pneg %p117
        %s724 = sand.u32 %s47, 1
        %s725 = scalar_lea.sflag [#allocation10], %s724
        %s726 = sand.u32 %s133, 1
        %s727 = scalar_lea.vmem [#allocation9], %s726
        %p728 = pneg %p146
        %p729 = pneg %p143
        %s730 = sand.u32 %s47, 1
        %s731 = scalar_lea.sflag [#allocation10], %s730
        %s732 = sand.u32 %s159, 1
        %s733 = scalar_lea.vmem [#allocation11], %s732
        %p734 = pneg %p172
        %p735 = pneg %p169
        %p736 = pneg %p193
        %p737 = pneg %p190
        %p738 = pneg %p214
        %p739 = pneg %p211
        %p740 = pneg %p235
        %p741 = pneg %p232
        %p742 = pneg %p256
        %p743 = pneg %p253
        %p744 = pneg %p277
        %p745 = pneg %p274
        %p746 = pneg %p298
        %p747 = pneg %p295
        %p748 = pneg %p319
        %p749 = pneg %p316
        %p750 = pneg %p340
        %p751 = pneg %p337
        %p752 = pneg %p366
        %p753 = pneg %p363
        %s754 = sand.u32 %s353, 1
        %s755 = scalar_lea.sflag [#allocation5], %s754
        %s756 = sand.u32 %s353, 1
        %s757 = smul.addr %s756, 32
        %s758 = scalar_lea.vmem [#allocation23], %s757
        %p759 = pneg %p392
        %p760 = pneg %p389
        %s761 = sand.u32 %s47, 1
        %s762 = scalar_lea.sflag [#allocation25], %s761
        %s763 = sand.u32 %s379, 1
        %s764 = smul.addr %s763, 64
        %s765 = scalar_lea.vmem [#allocation24], %s764
        %p766 = pneg %p418
        %p767 = pneg %p415
        %s768 = sand.u32 %s47, 1
        %s769 = scalar_lea.sflag [#allocation25], %s768
        %s770 = sand.u32 %s405, 1
        %s771 = scalar_lea.vmem [#allocation26], %s770
        %v773 = vld [vmem:[%s636] sm:$0xf]
        %v774 = vld [vmem:[%s636 + $0x4] sm:$0xf]
        %v775 = vld [vmem:[%s636 + $0x8] sm:$0xf]
        %v776 = vld [vmem:[%s636 + $0xc] sm:$0xf]
        %v777 = vld [vmem:[%s636 + $0x10] sm:$0xf]
        %v778 = vld [vmem:[%s636 + $0x14] sm:$0xf]
        %v779 = vld [vmem:[%s636 + $0x18] sm:$0xf]
        %v780 = vld [vmem:[%s636 + $0x1c] sm:$0xf]
        %v781 = vld [vmem:[%s645] sm:$0xff]
        %v782 = vld [vmem:[%s654] sm:$0xff]
        %v783 = vld [vmem:[%s654 + $0x8] sm:$0xff]
        %v784 = vld [vmem:[%s654 + $0x10] sm:$0xff]
        %v785 = vld [vmem:[%s654 + $0x18] sm:$0xff]
        %v786 = vld [vmem:[%s654 + $0x20] sm:$0xff]
        %v787 = vld [vmem:[%s654 + $0x28] sm:$0xff]
        %v788 = vld [vmem:[%s654 + $0x30] sm:$0xff]
        %v789 = vld [vmem:[%s654 + $0x38] sm:$0xff]
        %v790 = vld [vmem:[%s662] sm:$0x1]
        %v791 = vld [vmem:[%s670] sm:$0x1]
        %v792 = vunpack.c.l.bf16 %v773
        %v793 = vunpack.c.l.bf16 %v774
        %v794 = vunpack.c.l.bf16 %v775
        %v795 = vunpack.c.l.bf16 %v776
        %v796 = vunpack.c.l.bf16 %v777
        %v797 = vunpack.c.l.bf16 %v778
        %v798 = vunpack.c.l.bf16 %v779
        %v799 = vunpack.c.l.bf16 %v780
        %800 = vadd.xlane.f32.xlu0 %v792
        %v801 = vpop.xlane.xlu0 %800
        %802 = vadd.xlane.f32.xlu0 %v793
        %v803 = vpop.xlane.xlu0 %802
        %804 = vadd.xlane.f32.xlu0 %v794
        %v805 = vpop.xlane.xlu0 %804
        %806 = vadd.xlane.f32.xlu0 %v795
        %v807 = vpop.xlane.xlu0 %806
        %808 = vadd.xlane.f32.xlu0 %v796
        %v809 = vpop.xlane.xlu0 %808
        %810 = vadd.xlane.f32.xlu0 %v797
        %v811 = vpop.xlane.xlu0 %810
        %812 = vadd.xlane.f32.xlu0 %v798
        %v813 = vpop.xlane.xlu0 %812
        %814 = vadd.xlane.f32.xlu0 %v799
        %v815 = vpop.xlane.xlu0 %814
        %v816 = vmul.f32 %v801, 0.015625
        %v817 = vmul.f32 %v803, 0.015625
        %v818 = vmul.f32 %v805, 0.015625
        %v819 = vmul.f32 %v807, 0.015625
        %v820 = vmul.f32 %v809, 0.015625
        %v821 = vmul.f32 %v811, 0.015625
        %v822 = vmul.f32 %v813, 0.015625
        %v823 = vmul.f32 %v815, 0.015625
        %v824 = vmul.f32 %v816, %v782
        %v825 = vmul.f32 %v817, %v783
        %v826 = vmul.f32 %v818, %v784
        %v827 = vmul.f32 %v819, %v785
        %v828 = vmul.f32 %v820, %v786
        %v829 = vmul.f32 %v821, %v787
        %v830 = vmul.f32 %v822, %v788
        %v831 = vmul.f32 %v823, %v789
        %v833 = vlaneseq
        %v834 = vshrl.u32 %v833, 7
        %v835 = vsub.s32 0, %v834
        %v836 = vrot.slane %v790, %v835
        %v838 = vmul.f32 %v824, %v836
        %v839 = vmul.f32 %v825, %v836
        %v840 = vmul.f32 %v826, %v836
        %v841 = vmul.f32 %v827, %v836
        %v842 = vmul.f32 %v828, %v836
        %v843 = vmul.f32 %v829, %v836
        %v844 = vmul.f32 %v830, %v836
        %v845 = vmul.f32 %v831, %v836
        %v846 = vld [vmem:[#allocation12] sm:$0xff]
        %v847 = vld [vmem:[#allocation12 + $0x8] sm:$0xff]
        %v848 = vld [vmem:[#allocation12 + $0x10] sm:$0xff]
        %v849 = vld [vmem:[#allocation12 + $0x18] sm:$0xff]
        %v850 = vld [vmem:[#allocation14] sm:$0xff]
        %v851 = vld [vmem:[#allocation14 + $0x8] sm:$0xff]
        %v852 = vld [vmem:[#allocation14 + $0x10] sm:$0xff]
        %v853 = vld [vmem:[#allocation14 + $0x18] sm:$0xff]
        %855 = vset.pattern.permute.xlu0 0
        %856 = vperm.xlu0 %855, %v850
        %v857 = vpop.permute.xlu0 %856
        %860 = vset.pattern.permute.xlu0 0
        %861 = vperm.xlu0 %860, %v851
        %v862 = vpop.permute.xlu0 %861
        %865 = vset.pattern.permute.xlu0 0
        %866 = vperm.xlu0 %865, %v852
        %v867 = vpop.permute.xlu0 %866
        %870 = vset.pattern.permute.xlu0 0
        %871 = vperm.xlu0 %870, %v853
        %v872 = vpop.permute.xlu0 %871
        %vm874 = vcmask 523264
        %v876 = vsel %vm874, %v846, 0
        %v879 = vsel %vm874, %v847, 0
        %v882 = vsel %vm874, %v848, 0
        %v885 = vsel %vm874, %v849, 0
        %887 = vmatprep.subr.mxu0 0.0
        %888 = vmatpush1.msra.mxu0 %v838
        %889 = vmatprep.subr.mxu0 0.0
        %890 = vmatpush1.msra.mxu0 %v839
        %891 = vmatprep.subr.mxu0 0.0
        %892 = vmatpush1.msra.mxu0 %v840
        %893 = vmatprep.subr.mxu0 0.0
        %894 = vmatpush1.msra.mxu0 %v841
        %895 = vmatprep.subr.mxu0 0.0
        %896 = vmatpush1.msra.mxu0 %v842
        %897 = vmatprep.subr.mxu0 0.0
        %898 = vmatpush1.msra.mxu0 %v843
        %899 = vmatprep.subr.mxu0 0.0
        %900 = vmatpush1.msra.mxu0 %v844
        %901 = vmatprep.subr.mxu0 0.0
        %902 = vmatpush1.msra.mxu0 %v845
        %903 = vmatprep.subr.mxu0 0.0
        %904 = vmatpush1.msra.mxu0 0.0
        %905 = vmatprep.subr.mxu0 0.0
        %906 = vmatpush1.msra.mxu0 0.0
        %907 = vmatprep.subr.mxu0 0.0
        %908 = vmatpush1.msra.mxu0 0.0
        %909 = vmatprep.subr.mxu0 0.0
        %910 = vmatpush1.msra.mxu0 0.0
        %911 = vmatprep.subr.mxu0 0.0
        %912 = vmatpush1.msra.mxu0 0.0
        %913 = vmatprep.subr.mxu0 0.0
        %914 = vmatpush1.msra.mxu0 0.0
        %915 = vmatprep.subr.mxu0 0.0
        %916 = vmatpush1.msra.mxu0 0.0
        %917 = vmatprep.subr.mxu0 0.0
        %918 = vmatpush1.msra.mxu0 0.0
        %919 = vmatprep.subr.mxu0 0.0
        %920 = vmatpush1.msra.mxu0 0.0
        %921 = vmatprep.subr.mxu0 0.0
        %922 = vmatpush1.msra.mxu0 0.0
        %923 = vmatprep.subr.mxu0 0.0
        %924 = vmatpush1.msra.mxu0 0.0
        %925 = vmatprep.subr.mxu0 0.0
        %926 = vmatpush1.msra.mxu0 0.0
        %927 = vmatprep.subr.mxu0 0.0
        %928 = vmatpush1.msra.mxu0 0.0
        %929 = vmatprep.subr.mxu0 0.0
        %930 = vmatpush1.msra.mxu0 0.0
        %931 = vmatprep.subr.mxu0 0.0
        %932 = vmatpush1.msra.mxu0 0.0
        %933 = vmatprep.subr.mxu0 0.0
        %934 = vmatpush1.msra.mxu0 0.0
        %935 = vmatprep.subr.mxu0 0.0
        %936 = vmatpush1.msra.mxu0 0.0
        %937 = vmatprep.subr.mxu0 0.0
        %938 = vmatpush1.msra.mxu0 0.0
        %939 = vmatprep.subr.mxu0 0.0
        %940 = vmatpush1.msra.mxu0 0.0
        %941 = vmatprep.subr.mxu0 0.0
        %942 = vmatpush1.msra.mxu0 0.0
        %943 = vmatprep.subr.mxu0 0.0
        %944 = vmatpush1.msra.mxu0 0.0
        %945 = vmatprep.subr.mxu0 0.0
        %946 = vmatpush1.msra.mxu0 0.0
        %947 = vmatprep.subr.mxu0 0.0
        %948 = vmatpush1.msra.mxu0 0.0
        %949 = vmatprep.subr.mxu0 0.0
        %950 = vmatpush1.msra.mxu0 0.0
        %951 = vmatprep.mubr.f32.mxu0 0.0
        %952 = vmatmul.mubr.f32.gmra.mrb[0].mxu0 %v876
        %v953 = vpop.f32.mrb[0].mxu0
        %v954 = vadd.f32 %v857, %v953
        %v955 = vpop.f32.mrb[0].mxu0
        %956 = vmatprep.mubr.f32.mxu0 0.0
        %957 = vmatmul.mubr.f32.gmra.mrb[0].mxu0 %v879
        %v958 = vpop.f32.mrb[0].mxu0
        %v959 = vadd.f32 %v862, %v958
        %v960 = vpop.f32.mrb[0].mxu0
        %961 = vmatprep.mubr.f32.mxu0 0.0
        %962 = vmatmul.mubr.f32.gmra.mrb[0].mxu0 %v882
        %v963 = vpop.f32.mrb[0].mxu0
        %v964 = vadd.f32 %v867, %v963
        %v965 = vpop.f32.mrb[0].mxu0
        %966 = vmatprep.mubr.f32.mxu0 0.0
        %967 = vmatmul.mubr.f32.gmra.mrb[0].mxu0 %v885
        %v968 = vpop.f32.mrb[0].mxu0
        %v969 = vadd.f32 %v872, %v968
        %v970 = vpop.f32.mrb[0].mxu0
        %971 = vdwg.mxu0
        %v972 = vtanh.pop %v954
        %v973 = vtanh.pop %v959
        %v974 = vtanh.pop %v964
        %v975 = vtanh.pop %v969
        %v976 = vld [vmem:[#allocation15] sm:$0xff]
        %v977 = vld [vmem:[#allocation15 + $0x8] sm:$0xff]
        %v978 = vld [vmem:[#allocation15 + $0x10] sm:$0xff]
        %v979 = vld [vmem:[#allocation15 + $0x18] sm:$0xff]
        %981 = vset.pattern.permute.xlu0 0
        %982 = vperm.xlu0 %981, %v976
        %v983 = vpop.permute.xlu0 %982
        %986 = vset.pattern.permute.xlu0 0
        %987 = vperm.xlu0 %986, %v977
        %v988 = vpop.permute.xlu0 %987
        %991 = vset.pattern.permute.xlu0 0
        %992 = vperm.xlu0 %991, %v978
        %v993 = vpop.permute.xlu0 %992
        %996 = vset.pattern.permute.xlu0 0
        %997 = vperm.xlu0 %996, %v979
        %v998 = vpop.permute.xlu0 %997
        %v1000 = vmul.f32 %v983, %v972
        %v1001 = vmul.f32 %v988, %v973
        %v1002 = vmul.f32 %v993, %v974
        %v1003 = vmul.f32 %v998, %v975
        %vm1004 = vcmask 64512
        %v1005 = vsel %vm1004, %v1000, 0.0
        %v1006 = vsel %vm1004, %v1001, 0.0
        %v1007 = vadd.f32 %v1005, %v1006
        %v1008 = vsel %vm1004, %v1002, 0.0
        %v1009 = vadd.f32 %v1007, %v1008
        %v1010 = vsel %vm1004, %v1003, 0.0
        %v1011 = vadd.f32 %v1009, %v1010
        %v1012 = vrot.slane %v1011, 4
        %v1013 = vadd.f32 %v1011, %v1012
        %v1014 = vrot.slane %v1013, 2
        %v1015 = vadd.f32 %v1013, %v1014
        %v1016 = vrot.slane %v1015, 1
        %v1017 = vadd.f32 %v1015, %v1016
        %s1018 = sld [smem:[#allocation2]]
        %v1019 = vstv %s1018
        %v1020 = vadd.f32 %v1017, %v1019
        %vm1021 = vcmask 57344
        %1022 = vst.msk [vmem:[%s771] sm:$0x1] %vm1021, %v1020
        %v1023 = vmul.f32 %v1020, 10.0
        %v1024 = vsel %vm1004, %v1023, -inf
        %1025 = vmax.xlane.f32.xlu0 %v1024
        %v1026 = vpop.xlane.xlu0 %1025
        %v1027 = vsub.f32 %v1023, %v1026
        %v1028 = vmul.f32 %v1027, 1.442695
        %v1029 = vpow.pop %v1028
        %v1030 = vsel %vm1004, %v1029, 0.0
        %1031 = vadd.xlane.f32.xlu0 %v1030
        %v1032 = vpop.xlane.xlu0 %1031
        %v1033 = vrcp.pop %v1032
        %v1034 = vmul.f32 %v1029, %v1033
        %v1035 = vlaneseq
        %v1036 = vand.u32 %v1035, 127
        %vm1037 = vcmp.eq.s32.totalorder %v1036, 0
        %v1038 = vsel %vm1037, 0.0, %v791
        %v1039 = vsel %vm1021, %v1038, 0.0
        %1040 = vadd.xlane.f32.xlu0 %v1039
        %v1041 = vpop.xlane.xlu0 %1040
        %v1042 = vcvt.f32.s32.to.zero.pseudo %v1041
        %vm1043 = vcmp.eq.s32.totalorder %v1036, %v1042
        %v1044 = vsel %vm1043, 0.0, %v1038
        %v1045 = vmul.f32 %v1034, %v1044
        %v1046 = vsel %vm1021, %v1045, 0.0
        %1047 = vadd.xlane.f32.xlu0 %v1046
        %v1048 = vpop.xlane.xlu0 %1047
        %v1049 = vadd.f32 %v1048, 1e-08
        %v1050 = vrcp.pop %v1049
        %v1051 = vmul.f32 %v1045, %v1050
        %v1052 = vlaneseq
        %v1053 = vshrl.u32 %v1052, 7
        %v1054 = vsub.s32 0, %v1053
        %v1055 = vrot.slane %v1051, %v1054
        %v1056 = vmul.f32 %v782, %v1055
        %v1057 = vmul.f32 %v783, %v1055
        %v1058 = vmul.f32 %v784, %v1055
        %v1059 = vmul.f32 %v785, %v1055
        %v1060 = vmul.f32 %v786, %v1055
        %v1061 = vmul.f32 %v787, %v1055
        %v1062 = vmul.f32 %v788, %v1055
        %v1063 = vmul.f32 %v789, %v1055
        %v1064 = vsel %vm1004, %v1056, 0.0
        %1065 = vadd.xlane.f32.xlu0 %v1064
        %v1066 = vpop.xlane.xlu0 %1065
        %v1067 = vsel %vm1004, %v1057, 0.0
        %1068 = vadd.xlane.f32.xlu0 %v1067
        %v1069 = vpop.xlane.xlu0 %1068
        %v1070 = vsel %vm1004, %v1058, 0.0
        %1071 = vadd.xlane.f32.xlu0 %v1070
        %v1072 = vpop.xlane.xlu0 %1071
        %v1073 = vsel %vm1004, %v1059, 0.0
        %1074 = vadd.xlane.f32.xlu0 %v1073
        %v1075 = vpop.xlane.xlu0 %1074
        %v1076 = vsel %vm1004, %v1060, 0.0
        %1077 = vadd.xlane.f32.xlu0 %v1076
        %v1078 = vpop.xlane.xlu0 %1077
        %v1079 = vsel %vm1004, %v1061, 0.0
        %1080 = vadd.xlane.f32.xlu0 %v1079
        %v1081 = vpop.xlane.xlu0 %1080
        %v1082 = vsel %vm1004, %v1062, 0.0
        %1083 = vadd.xlane.f32.xlu0 %v1082
        %v1084 = vpop.xlane.xlu0 %1083
        %v1085 = vsel %vm1004, %v1063, 0.0
        %1086 = vadd.xlane.f32.xlu0 %v1085
        %v1087 = vpop.xlane.xlu0 %1086
        %vm1088 = vcmask 7168
        %1089 = vst.msk [vmem:[%s765] sm:$0xff] %vm1088, %v1066
        %1090 = vst.msk [vmem:[%s765 + $0x8] sm:$0xff] %vm1088, %v1069
        %1091 = vst.msk [vmem:[%s765 + $0x10] sm:$0xff] %vm1088, %v1072
        %1092 = vst.msk [vmem:[%s765 + $0x18] sm:$0xff] %vm1088, %v1075
        %1093 = vst.msk [vmem:[%s765 + $0x20] sm:$0xff] %vm1088, %v1078
        %1094 = vst.msk [vmem:[%s765 + $0x28] sm:$0xff] %vm1088, %v1081
        %1095 = vst.msk [vmem:[%s765 + $0x30] sm:$0xff] %vm1088, %v1084
        %1096 = vst.msk [vmem:[%s765 + $0x38] sm:$0xff] %vm1088, %v1087
        %v1097 = vld [vmem:[#allocation17] sm:$0xff]
        %v1098 = vld [vmem:[#allocation17 + $0x8] sm:$0xff]
        %v1099 = vld [vmem:[#allocation17 + $0x10] sm:$0xff]
        %v1100 = vld [vmem:[#allocation17 + $0x18] sm:$0xff]
        %v1101 = vld [vmem:[#allocation17 + $0x20] sm:$0xff]
        %v1102 = vld [vmem:[#allocation17 + $0x28] sm:$0xff]
        %v1103 = vld [vmem:[#allocation17 + $0x30] sm:$0xff]
        %v1104 = vld [vmem:[#allocation17 + $0x38] sm:$0xff]
        %v1105 = vld [vmem:[#allocation17 + $0x40] sm:$0xff]
        %v1106 = vld [vmem:[#allocation17 + $0x48] sm:$0xff]
        %v1107 = vld [vmem:[#allocation17 + $0x50] sm:$0xff]
        %v1108 = vld [vmem:[#allocation17 + $0x58] sm:$0xff]
        %v1109 = vld [vmem:[#allocation17 + $0x60] sm:$0xff]
        %v1110 = vld [vmem:[#allocation17 + $0x68] sm:$0xff]
        %v1111 = vld [vmem:[#allocation17 + $0x70] sm:$0xff]
        %v1112 = vld [vmem:[#allocation17 + $0x78] sm:$0xff]
        %v1113 = vld [vmem:[#allocation18] sm:$0xff]
        %v1114 = vld [vmem:[#allocation18 + $0x8] sm:$0xff]
        %v1115 = vld [vmem:[#allocation18 + $0x10] sm:$0xff]
        %v1116 = vld [vmem:[#allocation18 + $0x18] sm:$0xff]
        %v1117 = vld [vmem:[#allocation18 + $0x20] sm:$0xff]
        %v1118 = vld [vmem:[#allocation18 + $0x28] sm:$0xff]
        %v1119 = vld [vmem:[#allocation18 + $0x30] sm:$0xff]
        %v1120 = vld [vmem:[#allocation18 + $0x38] sm:$0xff]
        %v1121 = vld [vmem:[#allocation18 + $0x40] sm:$0xff]
        %v1122 = vld [vmem:[#allocation18 + $0x48] sm:$0xff]
        %v1123 = vld [vmem:[#allocation18 + $0x50] sm:$0xff]
        %v1124 = vld [vmem:[#allocation18 + $0x58] sm:$0xff]
        %v1125 = vld [vmem:[#allocation18 + $0x60] sm:$0xff]
        %v1126 = vld [vmem:[#allocation18 + $0x68] sm:$0xff]
        %v1127 = vld [vmem:[#allocation18 + $0x70] sm:$0xff]
        %v1128 = vld [vmem:[#allocation18 + $0x78] sm:$0xff]
        %v1130 = vsel %vm874, %v1097, 0
        %v1133 = vsel %vm874, %v1098, 0
        %v1136 = vsel %vm874, %v1099, 0
        %v1139 = vsel %vm874, %v1100, 0
        %v1142 = vsel %vm874, %v1101, 0
        %v1145 = vsel %vm874, %v1102, 0
        %v1148 = vsel %vm874, %v1103, 0
        %v1151 = vsel %vm874, %v1104, 0
        %v1154 = vsel %vm874, %v1105, 0
        %v1157 = vsel %vm874, %v1106, 0
        %v1160 = vsel %vm874, %v1107, 0
        %v1163 = vsel %vm874, %v1108, 0
        %v1166 = vsel %vm874, %v1109, 0
        %v1169 = vsel %vm874, %v1110, 0
        %v1172 = vsel %vm874, %v1111, 0
        %v1175 = vsel %vm874, %v1112, 0
        %1177 = vmatprep.subr.mxu0 0.0
        %1178 = vmatpush1.msra.mxu0 %v1066
        %1179 = vmatprep.subr.mxu0 0.0
        %1180 = vmatpush1.msra.mxu0 %v1069
        %1181 = vmatprep.subr.mxu0 0.0
        %1182 = vmatpush1.msra.mxu0 %v1072
        %1183 = vmatprep.subr.mxu0 0.0
        %1184 = vmatpush1.msra.mxu0 %v1075
        %1185 = vmatprep.subr.mxu0 0.0
        %1186 = vmatpush1.msra.mxu0 %v1078
        %1187 = vmatprep.subr.mxu0 0.0
        %1188 = vmatpush1.msra.mxu0 %v1081
        %1189 = vmatprep.subr.mxu0 0.0
        %1190 = vmatpush1.msra.mxu0 %v1084
        %1191 = vmatprep.subr.mxu0 0.0
        %1192 = vmatpush1.msra.mxu0 %v1087
        %1193 = vmatprep.subr.mxu0 0.0
        %1194 = vmatpush1.msra.mxu0 0.0
        %1195 = vmatprep.subr.mxu0 0.0
        %1196 = vmatpush1.msra.mxu0 0.0
        %1197 = vmatprep.subr.mxu0 0.0
        %1198 = vmatpush1.msra.mxu0 0.0
        %1199 = vmatprep.subr.mxu0 0.0
        %1200 = vmatpush1.msra.mxu0 0.0
        %1201 = vmatprep.subr.mxu0 0.0
        %1202 = vmatpush1.msra.mxu0 0.0
        %1203 = vmatprep.subr.mxu0 0.0
        %1204 = vmatpush1.msra.mxu0 0.0
        %1205 = vmatprep.subr.mxu0 0.0
        %1206 = vmatpush1.msra.mxu0 0.0
        %1207 = vmatprep.subr.mxu0 0.0
        %1208 = vmatpush1.msra.mxu0 0.0
        %1209 = vmatprep.subr.mxu0 0.0
        %1210 = vmatpush1.msra.mxu0 0.0
        %1211 = vmatprep.subr.mxu0 0.0
        %1212 = vmatpush1.msra.mxu0 0.0
        %1213 = vmatprep.subr.mxu0 0.0
        %1214 = vmatpush1.msra.mxu0 0.0
        %1215 = vmatprep.subr.mxu0 0.0
        %1216 = vmatpush1.msra.mxu0 0.0
        %1217 = vmatprep.subr.mxu0 0.0
        %1218 = vmatpush1.msra.mxu0 0.0
        %1219 = vmatprep.subr.mxu0 0.0
        %1220 = vmatpush1.msra.mxu0 0.0
        %1221 = vmatprep.subr.mxu0 0.0
        %1222 = vmatpush1.msra.mxu0 0.0
        %1223 = vmatprep.subr.mxu0 0.0
        %1224 = vmatpush1.msra.mxu0 0.0
        %1225 = vmatprep.subr.mxu0 0.0
        %1226 = vmatpush1.msra.mxu0 0.0
        %1227 = vmatprep.subr.mxu0 0.0
        %1228 = vmatpush1.msra.mxu0 0.0
        %1229 = vmatprep.subr.mxu0 0.0
        %1230 = vmatpush1.msra.mxu0 0.0
        %1231 = vmatprep.subr.mxu0 0.0
        %1232 = vmatpush1.msra.mxu0 0.0
        %1233 = vmatprep.subr.mxu0 0.0
        %1234 = vmatpush1.msra.mxu0 0.0
        %1235 = vmatprep.subr.mxu0 0.0
        %1236 = vmatpush1.msra.mxu0 0.0
        %1237 = vmatprep.subr.mxu0 0.0
        %1238 = vmatpush1.msra.mxu0 0.0
        %1239 = vmatprep.subr.mxu0 0.0
        %1240 = vmatpush1.msra.mxu0 0.0
        %1241 = vmatprep.mubr.f32.mxu0 0.0
        %1242 = vmatmul.mubr.f32.gmra.mrb[0].mxu0 %v1130
        %v1243 = vpop.f32.mrb[0].mxu0
        %v1244 = vadd.f32 %v1113, %v1243
        %v1245 = vpop.f32.mrb[0].mxu0
        %1246 = vmatprep.mubr.f32.mxu0 0.0
        %1247 = vmatmul.mubr.f32.gmra.mrb[0].mxu0 %v1133
        %v1248 = vpop.f32.mrb[0].mxu0
        %v1249 = vadd.f32 %v1114, %v1248
        %v1250 = vpop.f32.mrb[0].mxu0
        %1251 = vmatprep.mubr.f32.mxu0 0.0
        %1252 = vmatmul.mubr.f32.gmra.mrb[0].mxu0 %v1136
        %v1253 = vpop.f32.mrb[0].mxu0
        %v1254 = vadd.f32 %v1115, %v1253
        %v1255 = vpop.f32.mrb[0].mxu0
        %1256 = vmatprep.mubr.f32.mxu0 0.0
        %1257 = vmatmul.mubr.f32.gmra.mrb[0].mxu0 %v1139
        %v1258 = vpop.f32.mrb[0].mxu0
        %v1259 = vadd.f32 %v1116, %v1258
        %v1260 = vpop.f32.mrb[0].mxu0
        %1261 = vmatprep.mubr.f32.mxu0 0.0
        %1262 = vmatmul.mubr.f32.gmra.mrb[0].mxu0 %v1142
        %v1263 = vpop.f32.mrb[0].mxu0
        %v1264 = vadd.f32 %v1117, %v1263
        %v1265 = vpop.f32.mrb[0].mxu0
        %1266 = vmatprep.mubr.f32.mxu0 0.0
        %1267 = vmatmul.mubr.f32.gmra.mrb[0].mxu0 %v1145
        %v1268 = vpop.f32.mrb[0].mxu0
        %v1269 = vadd.f32 %v1118, %v1268
        %v1270 = vpop.f32.mrb[0].mxu0
        %1271 = vmatprep.mubr.f32.mxu0 0.0
        %1272 = vmatmul.mubr.f32.gmra.mrb[0].mxu0 %v1148
        %v1273 = vpop.f32.mrb[0].mxu0
        %v1274 = vadd.f32 %v1119, %v1273
        %v1275 = vpop.f32.mrb[0].mxu0
        %1276 = vmatprep.mubr.f32.mxu0 0.0
        %1277 = vmatmul.mubr.f32.gmra.mrb[0].mxu0 %v1151
        %v1278 = vpop.f32.mrb[0].mxu0
        %v1279 = vadd.f32 %v1120, %v1278
        %v1280 = vpop.f32.mrb[0].mxu0
        %1281 = vmatprep.mubr.f32.mxu0 0.0
        %1282 = vmatmul.mubr.f32.gmra.mrb[0].mxu0 %v1154
        %v1283 = vpop.f32.mrb[0].mxu0
        %v1284 = vadd.f32 %v1121, %v1283
        %v1285 = vpop.f32.mrb[0].mxu0
        %1286 = vmatprep.mubr.f32.mxu0 0.0
        %1287 = vmatmul.mubr.f32.gmra.mrb[0].mxu0 %v1157
        %v1288 = vpop.f32.mrb[0].mxu0
        %v1289 = vadd.f32 %v1122, %v1288
        %v1290 = vpop.f32.mrb[0].mxu0
        %1291 = vmatprep.mubr.f32.mxu0 0.0
        %1292 = vmatmul.mubr.f32.gmra.mrb[0].mxu0 %v1160
        %v1293 = vpop.f32.mrb[0].mxu0
        %v1294 = vadd.f32 %v1123, %v1293
        %v1295 = vpop.f32.mrb[0].mxu0
        %1296 = vmatprep.mubr.f32.mxu0 0.0
        %1297 = vmatmul.mubr.f32.gmra.mrb[0].mxu0 %v1163
        %v1298 = vpop.f32.mrb[0].mxu0
        %v1299 = vadd.f32 %v1124, %v1298
        %v1300 = vpop.f32.mrb[0].mxu0
        %1301 = vmatprep.mubr.f32.mxu0 0.0
        %1302 = vmatmul.mubr.f32.gmra.mrb[0].mxu0 %v1166
        %v1303 = vpop.f32.mrb[0].mxu0
        %v1304 = vadd.f32 %v1125, %v1303
        %v1305 = vpop.f32.mrb[0].mxu0
        %1306 = vmatprep.mubr.f32.mxu0 0.0
        %1307 = vmatmul.mubr.f32.gmra.mrb[0].mxu0 %v1169
        %v1308 = vpop.f32.mrb[0].mxu0
        %v1309 = vadd.f32 %v1126, %v1308
        %v1310 = vpop.f32.mrb[0].mxu0
        %1311 = vmatprep.mubr.f32.mxu0 0.0
        %1312 = vmatmul.mubr.f32.gmra.mrb[0].mxu0 %v1172
        %v1313 = vpop.f32.mrb[0].mxu0
        %v1314 = vadd.f32 %v1127, %v1313
        %v1315 = vpop.f32.mrb[0].mxu0
        %1316 = vmatprep.mubr.f32.mxu0 0.0
        %1317 = vmatmul.mubr.f32.gmra.mrb[0].mxu0 %v1175
        %v1318 = vpop.f32.mrb[0].mxu0
        %v1319 = vadd.f32 %v1128, %v1318
        %v1320 = vpop.f32.mrb[0].mxu0
        %1321 = vdwg.mxu0
        %v1322 = vtanh.pop %v1244
        %v1323 = vtanh.pop %v1249
        %v1324 = vtanh.pop %v1254
        %v1325 = vtanh.pop %v1259
        %v1326 = vtanh.pop %v1264
        %v1327 = vtanh.pop %v1269
        %v1328 = vtanh.pop %v1274
        %v1329 = vtanh.pop %v1279
        %v1330 = vtanh.pop %v1284
        %v1331 = vtanh.pop %v1289
        %v1332 = vtanh.pop %v1294
        %v1333 = vtanh.pop %v1299
        %v1334 = vtanh.pop %v1304
        %v1335 = vtanh.pop %v1309
        %v1336 = vtanh.pop %v1314
        %v1337 = vtanh.pop %v1319
        %v1338 = vld [vmem:[#allocation20] sm:$0xf]
        %v1339 = vld [vmem:[#allocation20 + $0x4] sm:$0xf]
        %v1340 = vld [vmem:[#allocation20 + $0x8] sm:$0xf]
        %v1341 = vld [vmem:[#allocation20 + $0xc] sm:$0xf]
        %v1342 = vld [vmem:[#allocation20 + $0x10] sm:$0xf]
        %v1343 = vld [vmem:[#allocation20 + $0x14] sm:$0xf]
        %v1344 = vld [vmem:[#allocation20 + $0x18] sm:$0xf]
        %v1345 = vld [vmem:[#allocation20 + $0x1c] sm:$0xf]
        %v1346 = vld [vmem:[#allocation21] sm:$0xff]
        %v1347 = vld [vmem:[#allocation21 + $0x8] sm:$0xff]
        %v1348 = vld [vmem:[#allocation21 + $0x10] sm:$0xff]
        %v1349 = vld [vmem:[#allocation21 + $0x18] sm:$0xff]
        %v1350 = vld [vmem:[#allocation21 + $0x20] sm:$0xff]
        %v1351 = vld [vmem:[#allocation21 + $0x28] sm:$0xff]
        %v1352 = vld [vmem:[#allocation21 + $0x30] sm:$0xff]
        %v1353 = vld [vmem:[#allocation21 + $0x38] sm:$0xff]
        %v1355 = vsel %vm1004, %v1346, 0
        %v1358 = vsel %vm1004, %v1347, 0
        %v1361 = vsel %vm1004, %v1348, 0
        %v1364 = vsel %vm1004, %v1349, 0
        %v1367 = vsel %vm1004, %v1350, 0
        %v1370 = vsel %vm1004, %v1351, 0
        %v1373 = vsel %vm1004, %v1352, 0
        %v1376 = vsel %vm1004, %v1353, 0
        %1378 = vmatprep.subr.mxu0 0.0
        %1379 = vmatpush1.msra.mxu0 %v781
        %1380 = vmatprep.subr.mxu0 0.0
        %1381 = vmatpush1.msra.mxu0 0.0
        %1382 = vmatprep.subr.mxu0 0.0
        %1383 = vmatpush1.msra.mxu0 0.0
        %1384 = vmatprep.subr.mxu0 0.0
        %1385 = vmatpush1.msra.mxu0 0.0
        %1386 = vmatprep.subr.mxu0 0.0
        %1387 = vmatpush1.msra.mxu0 0.0
        %1388 = vmatprep.subr.mxu0 0.0
        %1389 = vmatpush1.msra.mxu0 0.0
        %1390 = vmatprep.subr.mxu0 0.0
        %1391 = vmatpush1.msra.mxu0 0.0
        %1392 = vmatprep.subr.mxu0 0.0
        %1393 = vmatpush1.msra.mxu0 0.0
        %1394 = vmatprep.subr.mxu0 0.0
        %1395 = vmatpush1.msra.mxu0 0.0
        %1396 = vmatprep.subr.mxu0 0.0
        %1397 = vmatpush1.msra.mxu0 0.0
        %1398 = vmatprep.subr.mxu0 0.0
        %1399 = vmatpush1.msra.mxu0 0.0
        %1400 = vmatprep.subr.mxu0 0.0
        %1401 = vmatpush1.msra.mxu0 0.0
        %1402 = vmatprep.subr.mxu0 0.0
        %1403 = vmatpush1.msra.mxu0 0.0
        %1404 = vmatprep.subr.mxu0 0.0
        %1405 = vmatpush1.msra.mxu0 0.0
        %1406 = vmatprep.subr.mxu0 0.0
        %1407 = vmatpush1.msra.mxu0 0.0
        %1408 = vmatprep.subr.mxu0 0.0
        %1409 = vmatpush1.msra.mxu0 0.0
        %1410 = vmatprep.subr.mxu0 0.0
        %1411 = vmatpush1.msra.mxu0 0.0
        %1412 = vmatprep.subr.mxu0 0.0
        %1413 = vmatpush1.msra.mxu0 0.0
        %1414 = vmatprep.subr.mxu0 0.0
        %1415 = vmatpush1.msra.mxu0 0.0
        %1416 = vmatprep.subr.mxu0 0.0
        %1417 = vmatpush1.msra.mxu0 0.0
        %1418 = vmatprep.subr.mxu0 0.0
        %1419 = vmatpush1.msra.mxu0 0.0
        %1420 = vmatprep.subr.mxu0 0.0
        %1421 = vmatpush1.msra.mxu0 0.0
        %1422 = vmatprep.subr.mxu0 0.0
        %1423 = vmatpush1.msra.mxu0 0.0
        %1424 = vmatprep.subr.mxu0 0.0
        %1425 = vmatpush1.msra.mxu0 0.0
        %1426 = vmatprep.subr.mxu0 0.0
        %1427 = vmatpush1.msra.mxu0 0.0
        %1428 = vmatprep.subr.mxu0 0.0
        %1429 = vmatpush1.msra.mxu0 0.0
        %1430 = vmatprep.subr.mxu0 0.0
        %1431 = vmatpush1.msra.mxu0 0.0
        %1432 = vmatprep.subr.mxu0 0.0
        %1433 = vmatpush1.msra.mxu0 0.0
        %1434 = vmatprep.subr.mxu0 0.0
        %1435 = vmatpush1.msra.mxu0 0.0
        %1436 = vmatprep.subr.mxu0 0.0
        %1437 = vmatpush1.msra.mxu0 0.0
        %1438 = vmatprep.subr.mxu0 0.0
        %1439 = vmatpush1.msra.mxu0 0.0
        %1440 = vmatprep.subr.mxu0 0.0
        %1441 = vmatpush1.msra.mxu0 0.0
        %1442 = vmatprep.mubr.f32.mxu0 0.0
        %1443 = vmatmul.mubr.f32.gmra.mrb[0].mxu0 %v1355
        %v1444 = vpop.f32.mrb[0].mxu0
        %v1445 = vadd.f32 0.0, %v1444
        %v1446 = vpop.f32.mrb[0].mxu0
        %1447 = vmatprep.mubr.f32.mxu0 0.0
        %1448 = vmatmul.mubr.f32.gmra.mrb[0].mxu0 %v1358
        %v1449 = vpop.f32.mrb[0].mxu0
        %v1450 = vadd.f32 0.0, %v1449
        %v1451 = vpop.f32.mrb[0].mxu0
        %1452 = vmatprep.mubr.f32.mxu0 0.0
        %1453 = vmatmul.mubr.f32.gmra.mrb[0].mxu0 %v1361
        %v1454 = vpop.f32.mrb[0].mxu0
        %v1455 = vadd.f32 0.0, %v1454
        %v1456 = vpop.f32.mrb[0].mxu0
        %1457 = vmatprep.mubr.f32.mxu0 0.0
        %1458 = vmatmul.mubr.f32.gmra.mrb[0].mxu0 %v1364
        %v1459 = vpop.f32.mrb[0].mxu0
        %v1460 = vadd.f32 0.0, %v1459
        %v1461 = vpop.f32.mrb[0].mxu0
        %1462 = vmatprep.mubr.f32.mxu0 0.0
        %1463 = vmatmul.mubr.f32.gmra.mrb[0].mxu0 %v1367
        %v1464 = vpop.f32.mrb[0].mxu0
        %v1465 = vadd.f32 0.0, %v1464
        %v1466 = vpop.f32.mrb[0].mxu0
        %1467 = vmatprep.mubr.f32.mxu0 0.0
        %1468 = vmatmul.mubr.f32.gmra.mrb[0].mxu0 %v1370
        %v1469 = vpop.f32.mrb[0].mxu0
        %v1470 = vadd.f32 0.0, %v1469
        %v1471 = vpop.f32.mrb[0].mxu0
        %1472 = vmatprep.mubr.f32.mxu0 0.0
        %1473 = vmatmul.mubr.f32.gmra.mrb[0].mxu0 %v1373
        %v1474 = vpop.f32.mrb[0].mxu0
        %v1475 = vadd.f32 0.0, %v1474
        %v1476 = vpop.f32.mrb[0].mxu0
        %1477 = vmatprep.mubr.f32.mxu0 0.0
        %1478 = vmatmul.mubr.f32.gmra.mrb[0].mxu0 %v1376
        %v1479 = vpop.f32.mrb[0].mxu0
        %v1480 = vadd.f32 0.0, %v1479
        %v1481 = vpop.f32.mrb[0].mxu0
        %1482 = vdwg.mxu0
        %v1491 = vunpack.c.l.b16 %v1338
        %v1492 = vunpack.c.l.b16 %v1339
        %v1493 = vunpack.c.l.b16 %v1340
        %v1494 = vunpack.c.l.b16 %v1341
        %v1495 = vunpack.c.l.b16 %v1342
        %v1496 = vunpack.c.l.b16 %v1343
        %v1497 = vunpack.c.l.b16 %v1344
        %v1498 = vunpack.c.l.b16 %v1345
        %v1499 = vpack.c.b16 %v1492, %v1491
        %v1500 = vpack.c.b16 %v1494, %v1493
        %v1501 = vpack.c.b16 %v1496, %v1495
        %v1502 = vpack.c.b16 %v1498, %v1497
        %v1511 = vunpack.c.l.b16 %v773
        %v1512 = vunpack.c.l.b16 %v774
        %v1513 = vunpack.c.l.b16 %v775
        %v1514 = vunpack.c.l.b16 %v776
        %v1515 = vunpack.c.l.b16 %v777
        %v1516 = vunpack.c.l.b16 %v778
        %v1517 = vunpack.c.l.b16 %v779
        %v1518 = vunpack.c.l.b16 %v780
        %v1519 = vpack.c.b16 %v1512, %v1511
        %v1520 = vpack.c.b16 %v1514, %v1513
        %v1521 = vpack.c.b16 %v1516, %v1515
        %v1522 = vpack.c.b16 %v1518, %v1517
        %v1528 = vsel %vm874, %v1499, 0
        %v1531 = vsel %vm874, %v1500, 0
        %v1534 = vsel %vm874, %v1501, 0
        %v1537 = vsel %vm874, %v1502, 0
        %1539 = vmatprep.subr.bf16.mxu0 0
        %1540 = vmatpush1.bf16.msra.mxu0 %v1519
        %1541 = vmatprep.subr.bf16.mxu0 0
        %1542 = vmatpush1.bf16.msra.mxu0 %v1520
        %1543 = vmatprep.subr.bf16.mxu0 0
        %1544 = vmatpush1.bf16.msra.mxu0 %v1521
        %1545 = vmatprep.subr.bf16.mxu0 0
        %1546 = vmatpush1.bf16.msra.mxu0 %v1522
        %1547 = vmatprep.subr.bf16.mxu0 0
        %1548 = vmatpush1.bf16.msra.mxu0 0
        %1549 = vmatprep.subr.bf16.mxu0 0
        %1550 = vmatpush1.bf16.msra.mxu0 0
        %1551 = vmatprep.subr.bf16.mxu0 0
        %1552 = vmatpush1.bf16.msra.mxu0 0
        %1553 = vmatprep.subr.bf16.mxu0 0
        %1554 = vmatpush1.bf16.msra.mxu0 0
        %1555 = vmatprep.subr.bf16.mxu0 0
        %1556 = vmatpush1.bf16.msra.mxu0 0
        %1557 = vmatprep.subr.bf16.mxu0 0
        %1558 = vmatpush1.bf16.msra.mxu0 0
        %1559 = vmatprep.subr.bf16.mxu0 0
        %1560 = vmatpush1.bf16.msra.mxu0 0
        %1561 = vmatprep.subr.bf16.mxu0 0
        %1562 = vmatpush1.bf16.msra.mxu0 0
        %1563 = vmatprep.subr.bf16.mxu0 0
        %1564 = vmatpush1.bf16.msra.mxu0 0
        %1565 = vmatprep.subr.bf16.mxu0 0
        %1566 = vmatpush1.bf16.msra.mxu0 0
        %1567 = vmatprep.subr.bf16.mxu0 0
        %1568 = vmatpush1.bf16.msra.mxu0 0
        %1569 = vmatprep.subr.bf16.mxu0 0
        %1570 = vmatpush1.bf16.msra.mxu0 0
        %1571 = vmatprep.mubr.bf16.mxu0 0
        %1572 = vmatmul.mubr.bf16.gmra.mrb[0].mxu0 %v1528
        %v1573 = vpop.f32.mrb[0].mxu0
        %v1574 = vadd.f32 %v1445, %v1573
        %v1575 = vpop.f32.mrb[0].mxu0
        %v1576 = vpop.f32.mrb[0].mxu0
        %v1577 = vadd.f32 %v1450, %v1576
        %v1578 = vpop.f32.mrb[0].mxu0
        %1579 = vmatprep.mubr.bf16.mxu0 0
        %1580 = vmatmul.mubr.bf16.gmra.mrb[0].mxu0 %v1531
        %v1581 = vpop.f32.mrb[0].mxu0
        %v1582 = vadd.f32 %v1455, %v1581
        %v1583 = vpop.f32.mrb[0].mxu0
        %v1584 = vpop.f32.mrb[0].mxu0
        %v1585 = vadd.f32 %v1460, %v1584
        %v1586 = vpop.f32.mrb[0].mxu0
        %1587 = vmatprep.mubr.bf16.mxu0 0
        %1588 = vmatmul.mubr.bf16.gmra.mrb[0].mxu0 %v1534
        %v1589 = vpop.f32.mrb[0].mxu0
        %v1590 = vadd.f32 %v1465, %v1589
        %v1591 = vpop.f32.mrb[0].mxu0
        %v1592 = vpop.f32.mrb[0].mxu0
        %v1593 = vadd.f32 %v1470, %v1592
        %v1594 = vpop.f32.mrb[0].mxu0
        %1595 = vmatprep.mubr.bf16.mxu0 0
        %1596 = vmatmul.mubr.bf16.gmra.mrb[0].mxu0 %v1537
        %v1597 = vpop.f32.mrb[0].mxu0
        %v1598 = vadd.f32 %v1475, %v1597
        %v1599 = vpop.f32.mrb[0].mxu0
        %v1600 = vpop.f32.mrb[0].mxu0
        %v1601 = vadd.f32 %v1480, %v1600
        %v1602 = vpop.f32.mrb[0].mxu0
        %1603 = vdwg.mxu0
        %1604 = vadd.xlane.f32.xlu0 %v1574
        %v1605 = vpop.xlane.xlu0 %1604
        %1606 = vadd.xlane.f32.xlu0 %v1577
        %v1607 = vpop.xlane.xlu0 %1606
        %1608 = vadd.xlane.f32.xlu0 %v1582
        %v1609 = vpop.xlane.xlu0 %1608
        %1610 = vadd.xlane.f32.xlu0 %v1585
        %v1611 = vpop.xlane.xlu0 %1610
        %1612 = vadd.xlane.f32.xlu0 %v1590
        %v1613 = vpop.xlane.xlu0 %1612
        %1614 = vadd.xlane.f32.xlu0 %v1593
        %v1615 = vpop.xlane.xlu0 %1614
        %1616 = vadd.xlane.f32.xlu0 %v1598
        %v1617 = vpop.xlane.xlu0 %1616
        %1618 = vadd.xlane.f32.xlu0 %v1601
        %v1619 = vpop.xlane.xlu0 %1618
        %v1620 = vmul.f32 %v1574, %v1574
        %v1621 = vmul.f32 %v1577, %v1577
        %v1622 = vmul.f32 %v1582, %v1582
        %v1623 = vmul.f32 %v1585, %v1585
        %v1624 = vmul.f32 %v1590, %v1590
        %v1625 = vmul.f32 %v1593, %v1593
        %v1626 = vmul.f32 %v1598, %v1598
        %v1627 = vmul.f32 %v1601, %v1601
        %1628 = vadd.xlane.f32.xlu0 %v1620
        %v1629 = vpop.xlane.xlu0 %1628
        %1630 = vadd.xlane.f32.xlu0 %v1621
        %v1631 = vpop.xlane.xlu0 %1630
        %1632 = vadd.xlane.f32.xlu0 %v1622
        %v1633 = vpop.xlane.xlu0 %1632
        %1634 = vadd.xlane.f32.xlu0 %v1623
        %v1635 = vpop.xlane.xlu0 %1634
        %1636 = vadd.xlane.f32.xlu0 %v1624
        %v1637 = vpop.xlane.xlu0 %1636
        %1638 = vadd.xlane.f32.xlu0 %v1625
        %v1639 = vpop.xlane.xlu0 %1638
        %1640 = vadd.xlane.f32.xlu0 %v1626
        %v1641 = vpop.xlane.xlu0 %1640
        %1642 = vadd.xlane.f32.xlu0 %v1627
        %v1643 = vpop.xlane.xlu0 %1642
        %v1644 = vmul.f32 %v1605, 0.015625
        %v1645 = vmul.f32 %v1607, 0.015625
        %v1646 = vmul.f32 %v1609, 0.015625
        %v1647 = vmul.f32 %v1611, 0.015625
        %v1648 = vmul.f32 %v1613, 0.015625
        %v1649 = vmul.f32 %v1615, 0.015625
        %v1650 = vmul.f32 %v1617, 0.015625
        %v1651 = vmul.f32 %v1619, 0.015625
        %v1652 = vmul.f32 %v1629, 0.015625
        %v1653 = vmul.f32 %v1631, 0.015625
        %v1654 = vmul.f32 %v1633, 0.015625
        %v1655 = vmul.f32 %v1635, 0.015625
        %v1656 = vmul.f32 %v1637, 0.015625
        %v1657 = vmul.f32 %v1639, 0.015625
        %v1658 = vmul.f32 %v1641, 0.015625
        %v1659 = vmul.f32 %v1643, 0.015625
        %v1660 = vmul.f32 %v1644, %v1644
        %v1661 = vmul.f32 %v1645, %v1645
        %v1662 = vmul.f32 %v1646, %v1646
        %v1663 = vmul.f32 %v1647, %v1647
        %v1664 = vmul.f32 %v1648, %v1648
        %v1665 = vmul.f32 %v1649, %v1649
        %v1666 = vmul.f32 %v1650, %v1650
        %v1667 = vmul.f32 %v1651, %v1651
        %v1668 = vsub.f32 %v1652, %v1660
        %v1669 = vsub.f32 %v1653, %v1661
        %v1670 = vsub.f32 %v1654, %v1662
        %v1671 = vsub.f32 %v1655, %v1663
        %v1672 = vsub.f32 %v1656, %v1664
        %v1673 = vsub.f32 %v1657, %v1665
        %v1674 = vsub.f32 %v1658, %v1666
        %v1675 = vsub.f32 %v1659, %v1667
        %v1676 = vadd.f32 %v1668, 1e-05
        %v1677 = vadd.f32 %v1669, 1e-05
        %v1678 = vadd.f32 %v1670, 1e-05
        %v1679 = vadd.f32 %v1671, 1e-05
        %v1680 = vadd.f32 %v1672, 1e-05
        %v1681 = vadd.f32 %v1673, 1e-05
        %v1682 = vadd.f32 %v1674, 1e-05
        %v1683 = vadd.f32 %v1675, 1e-05
        %v1684 = vrsqrt.pop %v1676
        %v1685 = vrsqrt.pop %v1677
        %v1686 = vrsqrt.pop %v1678
        %v1687 = vrsqrt.pop %v1679
        %v1688 = vrsqrt.pop %v1680
        %v1689 = vrsqrt.pop %v1681
        %v1690 = vrsqrt.pop %v1682
        %v1691 = vrsqrt.pop %v1683
        %v1692 = vmul.f32 %v1322, %v1684
        %v1693 = vmul.f32 %v1323, %v1685
        %v1694 = vmul.f32 %v1324, %v1686
        %v1695 = vmul.f32 %v1325, %v1687
        %v1696 = vmul.f32 %v1326, %v1688
        %v1697 = vmul.f32 %v1327, %v1689
        %v1698 = vmul.f32 %v1328, %v1690
        %v1699 = vmul.f32 %v1329, %v1691
        %v1700 = vmul.f32 %v1644, %v1692
        %v1701 = vmul.f32 %v1645, %v1693
        %v1702 = vmul.f32 %v1646, %v1694
        %v1703 = vmul.f32 %v1647, %v1695
        %v1704 = vmul.f32 %v1648, %v1696
        %v1705 = vmul.f32 %v1649, %v1697
        %v1706 = vmul.f32 %v1650, %v1698
        %v1707 = vmul.f32 %v1651, %v1699
        %v1708 = vsub.f32 %v1330, %v1700
        %v1709 = vsub.f32 %v1331, %v1701
        %v1710 = vsub.f32 %v1332, %v1702
        %v1711 = vsub.f32 %v1333, %v1703
        %v1712 = vsub.f32 %v1334, %v1704
        %v1713 = vsub.f32 %v1335, %v1705
        %v1714 = vsub.f32 %v1336, %v1706
        %v1715 = vsub.f32 %v1337, %v1707
        %1717 = vset.pattern.permute.xlu0 0
        %1718 = vperm.xlu0 %1717, %v1692
        %v1719 = vpop.permute.xlu0 %1718
        %1722 = vset.pattern.permute.xlu0 0
        %1723 = vperm.xlu0 %1722, %v1693
        %v1724 = vpop.permute.xlu0 %1723
        %1727 = vset.pattern.permute.xlu0 0
        %1728 = vperm.xlu0 %1727, %v1694
        %v1729 = vpop.permute.xlu0 %1728
        %1732 = vset.pattern.permute.xlu0 0
        %1733 = vperm.xlu0 %1732, %v1695
        %v1734 = vpop.permute.xlu0 %1733
        %1737 = vset.pattern.permute.xlu0 0
        %1738 = vperm.xlu0 %1737, %v1696
        %v1739 = vpop.permute.xlu0 %1738
        %1742 = vset.pattern.permute.xlu0 0
        %1743 = vperm.xlu0 %1742, %v1697
        %v1744 = vpop.permute.xlu0 %1743
        %1747 = vset.pattern.permute.xlu0 0
        %1748 = vperm.xlu0 %1747, %v1698
        %v1749 = vpop.permute.xlu0 %1748
        %1752 = vset.pattern.permute.xlu0 0
        %1753 = vperm.xlu0 %1752, %v1699
        %v1754 = vpop.permute.xlu0 %1753
        %v1756 = vmul.f32 %v1719, %v1574
        %v1757 = vmul.f32 %v1724, %v1577
        %v1758 = vmul.f32 %v1729, %v1582
        %v1759 = vmul.f32 %v1734, %v1585
        %v1760 = vmul.f32 %v1739, %v1590
        %v1761 = vmul.f32 %v1744, %v1593
        %v1762 = vmul.f32 %v1749, %v1598
        %v1763 = vmul.f32 %v1754, %v1601
        %1765 = vset.pattern.permute.xlu0 0
        %1766 = vperm.xlu0 %1765, %v1708
        %v1767 = vpop.permute.xlu0 %1766
        %1770 = vset.pattern.permute.xlu0 0
        %1771 = vperm.xlu0 %1770, %v1709
        %v1772 = vpop.permute.xlu0 %1771
        %1775 = vset.pattern.permute.xlu0 0
        %1776 = vperm.xlu0 %1775, %v1710
        %v1777 = vpop.permute.xlu0 %1776
        %1780 = vset.pattern.permute.xlu0 0
        %1781 = vperm.xlu0 %1780, %v1711
        %v1782 = vpop.permute.xlu0 %1781
        %1785 = vset.pattern.permute.xlu0 0
        %1786 = vperm.xlu0 %1785, %v1712
        %v1787 = vpop.permute.xlu0 %1786
        %1790 = vset.pattern.permute.xlu0 0
        %1791 = vperm.xlu0 %1790, %v1713
        %v1792 = vpop.permute.xlu0 %1791
        %1795 = vset.pattern.permute.xlu0 0
        %1796 = vperm.xlu0 %1795, %v1714
        %v1797 = vpop.permute.xlu0 %1796
        %1800 = vset.pattern.permute.xlu0 0
        %1801 = vperm.xlu0 %1800, %v1715
        %v1802 = vpop.permute.xlu0 %1801
        %v1804 = vadd.f32 %v1756, %v1767
        %v1805 = vadd.f32 %v1757, %v1772
        %v1806 = vadd.f32 %v1758, %v1777
        %v1807 = vadd.f32 %v1759, %v1782
        %v1808 = vadd.f32 %v1760, %v1787
        %v1809 = vadd.f32 %v1761, %v1792
        %v1810 = vadd.f32 %v1762, %v1797
        %v1811 = vadd.f32 %v1763, %v1802
        %v1812 = vmax.f32 %v1804, 0.0
        %v1813 = vmax.f32 %v1805, 0.0
        %v1814 = vmax.f32 %v1806, 0.0
        %v1815 = vmax.f32 %v1807, 0.0
        %v1816 = vmax.f32 %v1808, 0.0
        %v1817 = vmax.f32 %v1809, 0.0
        %v1818 = vmax.f32 %v1810, 0.0
        %v1819 = vmax.f32 %v1811, 0.0
        %v1820 = vadd.f32 %v792, %v1812
        %v1821 = vadd.f32 %v793, %v1813
        %v1822 = vadd.f32 %v794, %v1814
        %v1823 = vadd.f32 %v795, %v1815
        %v1824 = vadd.f32 %v796, %v1816
        %v1825 = vadd.f32 %v797, %v1817
        %v1826 = vadd.f32 %v798, %v1818
        %v1827 = vadd.f32 %v799, %v1819
        %v1828 = vpack.c.bf16 %v1821, %v1820
        %v1829 = vpack.c.bf16 %v1823, %v1822
        %v1830 = vpack.c.bf16 %v1825, %v1824
        %v1831 = vpack.c.bf16 %v1827, %v1826
        %v1836 = vunpack.c.l.b16 %v1828
        %v1837 = vunpack.c.h.b16 %v1828
        %v1838 = vunpack.c.l.b16 %v1829
        %v1839 = vunpack.c.h.b16 %v1829
        %v1840 = vunpack.c.l.b16 %v1830
        %v1841 = vunpack.c.h.b16 %v1830
        %v1842 = vunpack.c.l.b16 %v1831
        %v1843 = vunpack.c.h.b16 %v1831
        %v1844 = vpack.c.b16 %v1836, %v1836
        %v1845 = vpack.c.b16 %v1837, %v1837
        %v1846 = vpack.c.b16 %v1838, %v1838
        %v1847 = vpack.c.b16 %v1839, %v1839
        %v1848 = vpack.c.b16 %v1840, %v1840
        %v1849 = vpack.c.b16 %v1841, %v1841
        %v1850 = vpack.c.b16 %v1842, %v1842
        %v1851 = vpack.c.b16 %v1843, %v1843
        %1860 = vst [vmem:[%s758] sm:$0xf] %v1844
        %1861 = vst [vmem:[%s758 + $0x4] sm:$0xf] %v1845
        %1862 = vst [vmem:[%s758 + $0x8] sm:$0xf] %v1846
        %1863 = vst [vmem:[%s758 + $0xc] sm:$0xf] %v1847
        %1864 = vst [vmem:[%s758 + $0x10] sm:$0xf] %v1848
        %1865 = vst [vmem:[%s758 + $0x14] sm:$0xf] %v1849
        %1866 = vst [vmem:[%s758 + $0x18] sm:$0xf] %v1850
        %1867 = vst [vmem:[%s758 + $0x1c] sm:$0xf] %v1851
        %s1868 = sand.u32 %s353, 1
        %s1869 = scalar_lea.sflag [#allocation5], %s1868
        %s1870 = sand.u32 %s353, 1
        %s1871 = smul.addr %s1870, 32
        %s1872 = scalar_lea.vmem [#allocation23], %s1871
        %s1873 = sand.u32 %s47, 1
        %s1874 = scalar_lea.sflag [#allocation25], %s1873
        %s1875 = sand.u32 %s379, 1
        %s1876 = smul.addr %s1875, 64
        %s1877 = scalar_lea.vmem [#allocation24], %s1876
        %s1878 = sand.u32 %s47, 1
        %s1879 = scalar_lea.sflag [#allocation25], %s1878
        %s1880 = sand.u32 %s405, 1
        %s1881 = scalar_lea.vmem [#allocation26], %s1880
        // Predicated region
        $region121: #{tpu_custom_call.1} parent=71 // pred_check
          %p1882 = pneg %p363
        $region122: #{tpu_custom_call.1} parent=71 // pred_check_branch
          %1884 = sbr.rel (%p1882) target = $region124
        $region123: #{tpu_custom_call.1} parent=71 // pred_region
          %s1886 = ssub.s32 512, 512
          %1887 = vsyncadd %s1869, %s1886
          %s1888 = smul.addr %s47, 8
          %s1889 = smul.addr %s1888, 64
          %s1890 = scalar_lea.hbm %s13, %s1889
          %s1891 = sshll.u32 %s1872, 4
          %s1892 = int_to_ptr.vmem [resolvable:$true] %s1891
          %1897 = dma.vmem_to_hbm [thread:$0]  %s1892, 512, %s1890, %s1869, 64, 64, 4
        $region124: #{tpu_custom_call.1} parent=71 // pred_fallthru
          _
        // Predicated region
        $region125: #{tpu_custom_call.1} parent=71 // pred_check
          %p1898 = pneg %p389
        $region126: #{tpu_custom_call.1} parent=71 // pred_check_branch
          %1900 = sbr.rel (%p1898) target = $region128
        $region127: #{tpu_custom_call.1} parent=71 // pred_region
          %s1902 = ssub.s32 1024, 1024
          %1903 = vsyncadd %s1874, %s1902
          %s1904 = smul.addr %s47, 8
          %s1905 = smul.addr %s1904, 128
          %s1906 = scalar_lea.hbm %s14, %s1905
          %s1907 = sshll.u32 %s1877, 4
          %s1908 = int_to_ptr.vmem [resolvable:$true] %s1907
          %1913 = dma.vmem_to_hbm [thread:$0]  %s1908, 1024, %s1906, %s1874, 128, 128, 8
        $region128: #{tpu_custom_call.1} parent=71 // pred_fallthru
          _
        // Predicated region
        $region129: #{tpu_custom_call.1} parent=71 // pred_check
          %p1914 = pneg %p415
        $region130: #{tpu_custom_call.1} parent=71 // pred_check_branch
          %1916 = sbr.rel (%p1914) target = $region132
        $region131: #{tpu_custom_call.1} parent=71 // pred_region
          %s1918 = ssub.s32 16, 16
          %1919 = vsyncadd %s1879, %s1918
          %s1920 = smul.addr %s47, 16
          %s1921 = scalar_lea.hbm %s15, %s1920
          %s1923 = sshll.u32 %s1881, 4
          %s1924 = int_to_ptr.vmem [resolvable:$true] %s1923
          %1926 = dma.vmem_to_hbm [thread:$0]  %s1924, 16, %s1921, %s1879
        $region132: #{tpu_custom_call.1} parent=71 // pred_fallthru
          _
      $region72: #{tpu_custom_call.1} parent=5 // pred_fallthru
        _
      %p1927 = scmp.le.s32.totalorder 2, %s42
      // Predicated region
      $region133: #{tpu_custom_call.1} parent=5 // pred_check
        %p1928 = pneg %p1927
      $region134: #{tpu_custom_call.1} parent=5 // pred_check_branch
        %1930 = sbr.rel (%p1928) target = $region136
      $region135: #{tpu_custom_call.1} parent=5 // pred_region
        %s1931 = ssub.s32 %s42, 2
        // Predicated region
        $region137: #{tpu_custom_call.1} parent=135 // pred_check
          %p1932 = pneg %p369
        $region138: #{tpu_custom_call.1} parent=135 // pred_check_branch
          %1934 = sbr.rel (%p1932) target = $region140
        $region139: #{tpu_custom_call.1} parent=135 // pred_region
          %s1935 = sand.u32 %s354, 1
          %s1936 = scalar_lea.sflag [#allocation5], %s1935
          %s1937 = sand.u32 %s354, 1
          %s1938 = smul.addr %s1937, 32
          %s1939 = scalar_lea.vmem [#allocation23], %s1938
          %1940 = dma.done %s1936, 512
        $region140: #{tpu_custom_call.1} parent=135 // pred_fallthru
          _
        // Predicated region
        $region141: #{tpu_custom_call.1} parent=135 // pred_check
          %p1941 = pneg %p395
        $region142: #{tpu_custom_call.1} parent=135 // pred_check_branch
          %1943 = sbr.rel (%p1941) target = $region144
        $region143: #{tpu_custom_call.1} parent=135 // pred_region
          %s1944 = sand.u32 %s48, 1
          %s1945 = scalar_lea.sflag [#allocation25], %s1944
          %s1946 = sand.u32 %s380, 1
          %s1947 = smul.addr %s1946, 64
          %s1948 = scalar_lea.vmem [#allocation24], %s1947
          %1949 = dma.done %s1945, 1024
        $region144: #{tpu_custom_call.1} parent=135 // pred_fallthru
          _
        // Predicated region
        $region145: #{tpu_custom_call.1} parent=135 // pred_check
          %p1950 = pneg %p421
        $region146: #{tpu_custom_call.1} parent=135 // pred_check_branch
          %1952 = sbr.rel (%p1950) target = $region148
        $region147: #{tpu_custom_call.1} parent=135 // pred_region
          %s1953 = sand.u32 %s48, 1
          %s1954 = scalar_lea.sflag [#allocation25], %s1953
          %s1955 = sand.u32 %s406, 1
          %s1956 = scalar_lea.vmem [#allocation26], %s1955
          %1957 = dma.done %s1954, 16
        $region148: #{tpu_custom_call.1} parent=135 // pred_fallthru
          _
      $region136: #{tpu_custom_call.1} parent=5 // pred_fallthru
        _
    $region6: #{tpu_custom_call.1} parent=1 // loop_footer
      %s46 = sadd.s32 1, %s42
    $region7: #{tpu_custom_call.1} parent=1 // loop_footer_branch
      %41 = sbr.rel target = $region3
    $region8: #{tpu_custom_call.1} parent=1 // loop_exit
      _
    %1958 = vsyncpa [#allocation4], 1
    %s1959 = scalar_lea.sflag [#allocation4], 1
    %1960 = vsyncpa %s1959, 1
    %1961 = vsyncpa [#allocation7], 1
    %s1962 = scalar_lea.sflag [#allocation7], 1
    %1963 = vsyncpa %s1962, 1
    %1964 = vsyncpa [#allocation10], 1
    %s1965 = scalar_lea.sflag [#allocation10], 1
    %1966 = vsyncpa %s1965, 1
    %1967 = vsyncpa [#allocation13], 1
    %1968 = vsyncpa [#allocation16], 1
    %1969 = vsyncpa [#allocation19], 1
    %1970 = vsyncpa [#allocation22], 1
    %1971 = vsyncpa [#allocation5], 1
    %s1972 = scalar_lea.sflag [#allocation5], 1
    %1973 = vsyncpa %s1972, 1
    %1974 = vsyncpa [#allocation25], 1
    %s1975 = scalar_lea.sflag [#allocation25], 1
    %1976 = vsyncpa %s1975, 1

</llo_original>
